<compile_context>
chip_gen: v5e
topology: v5e:2x2
jax: 0.10.0
libtpu: 0.0.40
codegen_flags: <defaults>
</compile_context>

<pallas_src>
import functools

import jax
import jax.numpy as jnp
from jax.experimental import pallas as pl
from jax.experimental.pallas import tpu as pltpu


# ----------------------------- helpers ------------------------------------- #

def fold_bn(gamma, beta, mean, var, eps=1e-5):
    scale = gamma / jnp.sqrt(var + eps)
    bias = beta - mean * scale
    return scale, bias


def _pick_tile_rows(out_h, out_w, target_rows=1024):
    """Largest th dividing out_h with th*out_w a multiple of 8 (sublane dense)
    and roughly target_rows matmul rows per grid step; fall back to th=out_h
    (then th*out_w equals the full flattened spatial dim, which is always a
    legal block)."""
    cap = max(1, min(out_h, target_rows // max(out_w, 1)))
    for th in range(cap, 0, -1):
        if out_h % th == 0 and (th * out_w) % 8 == 0:
            return th
    return out_h


# ----------------------------- Pallas kernel -------------------------------- #

def _make_fused_kernel(*, stride, th, H, W, out_w, has_proj):
    """Fully fused bottleneck block for one (batch, output-row-tile) grid step.

    conv1(1x1)+BN+ReLU (recomputed on the halo window) -> mask out conv2's
    zero-padding -> conv2(3x3, stride) as one im2col matmul +BN+ReLU ->
    conv3(1x1)+BN -> + shortcut (1x1 strided projection+BN or identity) -> ReLU.
    """
    s = stride
    Wo = out_w
    nrows_in = th * s + 2          # halo rows of (padded) h needed per tile

    def kernel(x_ref, w1_ref, b1_ref, w2_ref, b2_ref, w3_ref, b3_ref, *rest):
        if has_proj:
            if s > 1:
                ws_ref, bs_ref, o_ref, h_sc = rest
            else:
                ws_ref, bs_ref, o_ref = rest
                h_sc = None
        else:
            if s > 1:
                o_ref, h_sc = rest
            else:
                (o_ref,) = rest
                h_sc = None

        Wp = x_ref.shape[1]        # W + 2 (padded width)
        Cin = x_ref.shape[2]
        Cmid = w1_ref.shape[1]
        rows = th * Wo

        t = pl.program_id(1)
        h0 = pl.multiple_of(t * (th * s), th * s)   # first padded-h row of tile

        # ---- conv1 (1x1) + BN + ReLU on the halo window (recompute per tile).
        xwin = x_ref[pl.ds(h0, nrows_in), :, :]                  # (nrows, Wp, Cin)
        h = jnp.dot(xwin.reshape(nrows_in * Wp, Cin), w1_ref[...],
                    preferred_element_type=jnp.float32)
        h = jnp.maximum(h + b1_ref[...], 0.0).reshape(nrows_in, Wp, Cmid)

        # conv2's zero padding is applied AFTER conv1+BN+ReLU, so the padded
        # positions must be exactly 0 (the BN bias must not leak in).
        row_g = jax.lax.broadcasted_iota(jnp.int32, (nrows_in, Wp, Cmid), 0) + h0
        col_g = jax.lax.broadcasted_iota(jnp.int32, (nrows_in, Wp, Cmid), 1)
        valid = (row_g >= 1) & (row_g <= H) & (col_g >= 1) & (col_g <= W)
        h = jnp.where(valid, h, 0.0).astype(w2_ref.dtype)

        # ---- conv2 (3x3, stride) as ONE im2col matmul with K = 9*Cmid.
        if s == 1:
            def tap(ky, kx):                       # static value slices
                return h[ky:ky + th, kx:kx + Wo, :]
        else:
            h_sc[...] = h                          # strided reads via VMEM scratch

            def tap(ky, kx):
                win = h_sc[pl.ds(ky, th * s), pl.ds(kx, Wo, stride=s), :]
                return win.reshape(th, s, Wo, Cmid)[:, 0]

        slab = jnp.concatenate(
            [tap(ky, kx).reshape(rows, Cmid) for ky in range(3) for kx in range(3)],
            axis=-1)                                             # (rows, 9*Cmid)
        h2 = jnp.dot(slab, w2_ref[...], preferred_element_type=jnp.float32)
        h2 = jnp.maximum(h2 + b2_ref[...], 0.0).astype(w3_ref.dtype)

        # ---- conv3 (1x1) + BN.
        y = jnp.dot(h2, w3_ref[...],
                    preferred_element_type=jnp.float32) + b3_ref[...]

        # ---- shortcut: strided 1x1 projection + BN, or identity.
        if s == 1:
            xs = xwin[1:1 + th, 1:1 + Wo, :]
        else:
            xw = x_ref[pl.ds(h0 + 1, th * s), pl.ds(1, Wo, stride=s), :]
            xs = xw.reshape(th, s, Wo, Cin)[:, 0]
        xs2 = xs.reshape(rows, Cin)
        if has_proj:
            sc = jnp.dot(xs2.astype(ws_ref.dtype), ws_ref[...],
                         preferred_element_type=jnp.float32) + bs_ref[...]
        else:
            sc = xs2.astype(jnp.float32)

        # Lane/sublane-dense 2-D store: (th*Wo, Cout).
        o_ref[...] = jnp.maximum(y + sc, 0.0).astype(o_ref.dtype)

    return kernel


# ------------------------------ kernel wrapper ------------------------------- #

def fused_bottleneck(xpad, w1, b1, w2, b2, w3, b3, ws, bs, *,
                     stride, H, W, out_h, out_w, out_dtype):
    N, Hp, Wp, Cin = xpad.shape
    Cmid = w1.shape[1]
    Cout = w3.shape[1]
    has_proj = ws is not None
    s = stride

    th = _pick_tile_rows(out_h, out_w)
    grid = (N, out_h // th)
    nrows_in = th * s + 2

    in_specs = [
        # Full padded image per batch element; constant in t so it is fetched
        # once per n.  (Row-tiled halo blocks are a TODO for v7x's 64 MiB VMEM.)
        pl.BlockSpec((None, Hp, Wp, Cin), lambda n, t: (n, 0, 0, 0)),
        pl.BlockSpec((Cin, Cmid), lambda n, t: (0, 0)),
        pl.BlockSpec((1, Cmid), lambda n, t: (0, 0)),
        pl.BlockSpec((9 * Cmid, Cmid), lambda n, t: (0, 0)),
        pl.BlockSpec((1, Cmid), lambda n, t: (0, 0)),
        pl.BlockSpec((Cmid, Cout), lambda n, t: (0, 0)),
        pl.BlockSpec((1, Cout), lambda n, t: (0, 0)),
    ]
    args = [xpad, w1, b1, w2, b2, w3, b3]
    if has_proj:
        in_specs += [pl.BlockSpec((Cin, Cout), lambda n, t: (0, 0)),
                     pl.BlockSpec((1, Cout), lambda n, t: (0, 0))]
        args += [ws, bs]

    scratch_shapes = []
    if s > 1:
        scratch_shapes = [pltpu.VMEM((nrows_in, Wp, Cmid), w2.dtype)]

    return pl.pallas_call(
        _make_fused_kernel(stride=s, th=th, H=H, W=W, out_w=out_w,
                           has_proj=has_proj),
        out_shape=jax.ShapeDtypeStruct((N, out_h * out_w, Cout), out_dtype),
        grid=grid,
        in_specs=in_specs,
        out_specs=pl.BlockSpec((None, th * out_w, Cout), lambda n, t: (n, t, 0)),
        scratch_shapes=scratch_shapes,
        compiler_params=pltpu.CompilerParams(
            dimension_semantics=("parallel", "parallel"),
            # 64 MiB is fine on v5e/v6e (128 MiB physical); lower to <=48 MiB on
            # v7x (64 MiB per TensorCore) together with H row-tiling.
            vmem_limit_bytes=64 * 1024 * 1024),
    )(*args)


# ------------------------------ module wrapper ------------------------------- #

def init_params(key, in_channels, out_channels, stride, groups=1):
    # TODO(synk): grouped convolutions (groups > 1) are not implemented.
    assert groups == 1
    assert out_channels % 4 == 0
    cmid = out_channels // 4
    ks = list(jax.random.split(key, 16))

    def bn_params(k, c):
        k1, k2, k3, k4 = jax.random.split(k, 4)
        gamma = 1.0 + 0.1 * jax.random.normal(k1, (c,), jnp.float32)
        beta = 0.1 * jax.random.normal(k2, (c,), jnp.float32)
        mean = 0.1 * jax.random.normal(k3, (c,), jnp.float32)
        var = jax.random.uniform(k4, (c,), jnp.float32, 0.5, 1.5)
        return fold_bn(gamma, beta, mean, var)

    p = {}
    p["w1"] = 0.2 * jax.random.normal(ks[0], (in_channels, cmid), jnp.float32)
    p["s1"], p["b1"] = bn_params(ks[1], cmid)
    p["w2"] = 0.2 * jax.random.normal(ks[2], (3, 3, cmid, cmid), jnp.float32)
    p["s2"], p["b2"] = bn_params(ks[3], cmid)
    p["w3"] = 0.2 * jax.random.normal(ks[4], (cmid, out_channels), jnp.float32)
    p["s3"], p["b3"] = bn_params(ks[5], out_channels)
    if stride != 1 or in_channels != out_channels:
        p["ws"] = 0.2 * jax.random.normal(ks[6], (in_channels, out_channels),
                                          jnp.float32)
        p["ss"], p["bs"] = bn_params(ks[7], out_channels)
    return p


def bottleneck_forward(x_nchw, params, *, stride, compute_dtype=jnp.float32):
    """Pallas implementation of BottleneckResidualBlock.forward (inference BN).

    compute_dtype=jnp.bfloat16 gives ~2x MXU / half HBM traffic on v6e/v7x
    (f32 accumulation is kept inside the kernel); f32 is used for the exactness
    test below.  Production channel counts should be multiples of 128 for
    lane-dense layouts (test shapes here are tiny).
    """
    s = stride
    x = jnp.transpose(x_nchw, (0, 2, 3, 1)).astype(compute_dtype)  # NCHW->NHWC
    N, H, W, Cin = x.shape
    cmid = params["w1"].shape[1]
    cout = params["w3"].shape[1]
    Ho = (H - 1) // s + 1
    Wo = (W - 1) // s + 1
    pad_h = Ho * s - H   # extra bottom rows so the kernel's halo over-read stays in bounds

    # Fold BN scale into the conv weights once (wrapper side, XLA).
    w1 = (params["w1"] * params["s1"][None, :]).astype(compute_dtype)
    w2 = (params["w2"] * params["s2"][None, None, None, :]).astype(compute_dtype)
    w2 = w2.reshape(9 * cmid, cmid)               # im2col weight layout
    w3 = (params["w3"] * params["s3"][None, :]).astype(compute_dtype)
    b1 = params["b1"].reshape(1, cmid).astype(jnp.float32)
    b2 = params["b2"].reshape(1, cmid).astype(jnp.float32)
    b3 = params["b3"].reshape(1, cout).astype(jnp.float32)

    if "ws" in params:
        ws = (params["ws"] * params["ss"][None, :]).astype(compute_dtype)
        bs = params["bs"].reshape(1, cout).astype(jnp.float32)
    else:
        # Identity shortcut (module guarantees stride==1 and Cin==Cout here).
        ws = bs = None

    # One-time zero pad of the INPUT only (conv2's padding of h is produced
    # in-kernel by masking after the recomputed conv1).
    xpad = jnp.pad(x, ((0, 0), (1, 1 + pad_h), (1, 1), (0, 0)))

    out2d = fused_bottleneck(xpad, w1, b1, w2, b2, w3, b3, ws, bs,
                             stride=s, H=H, W=W, out_h=Ho, out_w=Wo,
                             out_dtype=x_nchw.dtype)
    out = out2d.reshape(N, Ho, Wo, cout)
    return jnp.transpose(out, (0, 3, 1, 2))       # NHWC -> NCHW


# -------------------------------- reference --------------------------------- #

def reference_forward(x_nchw, p, *, stride):
    x = jnp.transpose(x_nchw, (0, 2, 3, 1))

    def conv(x, w_hwio, strides, padding):
        return jax.lax.conv_general_dilated(
            x, w_hwio, window_strides=strides, padding=padding,
            dimension_numbers=("NHWC", "HWIO", "NHWC"),
            precision=jax.lax.Precision.HIGHEST)

    cin, cmid = p["w1"].shape
    h = conv(x, p["w1"].reshape(1, 1, cin, cmid), (1, 1), "VALID")
    h = jnp.maximum(h * p["s1"] + p["b1"], 0.0)
    h = conv(h, p["w2"], (stride, stride), ((1, 1), (1, 1)))
    h = jnp.maximum(h * p["s2"] + p["b2"], 0.0)
    h = conv(h, p["w3"].reshape(1, 1, *p["w3"].shape), (1, 1), "VALID")
    h = h * p["s3"] + p["b3"]
    if "ws" in p:
        sc = conv(x, p["ws"].reshape(1, 1, *p["ws"].shape),
                  (stride, stride), "VALID")
        sc = sc * p["ss"] + p["bs"]
    else:
        sc = x
    out = jnp.maximum(h + sc, 0.0)
    return jnp.transpose(out, (0, 3, 1, 2))


# ----------------------------------- main ------------------------------------ #

if __name__ == "__main__":
    key = jax.random.PRNGKey(0)
    k_x, k_p, k_x2, k_p2 = jax.random.split(key, 4)

    # Case 1: projection shortcut, stride 2.
    N, Cin, H, W = 2, 4, 16, 16
    Cout, stride = 16, 2
    x = jax.random.normal(k_x, (N, Cin, H, W), jnp.float32)
    params = init_params(k_p, Cin, Cout, stride)

    fwd = jax.jit(functools.partial(bottleneck_forward, stride=stride))
    out = jax.block_until_ready(fwd(x, params))
    ref = reference_forward(x, params, stride=stride)
    assert out.shape == (N, Cout, H // stride, W // stride)
    assert jnp.allclose(out, ref, atol=1e-3, rtol=1e-3), \
        f"max abs diff {jnp.max(jnp.abs(out - ref))}"

    # Case 2: identity shortcut, stride 1.
    x2 = jax.random.normal(k_x2, (N, 16, H, W), jnp.float32)
    params2 = init_params(k_p2, 16, 16, 1)
    fwd2 = jax.jit(functools.partial(bottleneck_forward, stride=1))
    out2 = jax.block_until_ready(fwd2(x2, params2))
    ref2 = reference_forward(x2, params2, stride=1)
    assert out2.shape == (N, 16, H, W)
    assert jnp.allclose(out2, ref2, atol=1e-3, rtol=1e-3), \
        f"max abs diff {jnp.max(jnp.abs(out2 - ref2))}"

    print("KERNEL_OK")
</pallas_src>

<mosaic_0001>
module attributes {stable_mosaic.version = 11 : i64} {
  func.func @kernel(%arg0: i32, %arg1: i32, %arg2: memref<1x18x18x4xf32, #tpu.memory_space<vmem>>, %arg3: memref<4x4xf32, #tpu.memory_space<vmem>>, %arg4: memref<1x4xf32, #tpu.memory_space<vmem>>, %arg5: memref<36x4xf32, #tpu.memory_space<vmem>>, %arg6: memref<1x4xf32, #tpu.memory_space<vmem>>, %arg7: memref<4x16xf32, #tpu.memory_space<vmem>>, %arg8: memref<1x16xf32, #tpu.memory_space<vmem>>, %arg9: memref<4x16xf32, #tpu.memory_space<vmem>>, %arg10: memref<1x16xf32, #tpu.memory_space<vmem>>, %arg11: memref<1x64x16xf32, #tpu.memory_space<vmem>>, %arg12: memref<18x18x4xf32, #tpu.memory_space<vmem>>) attributes {dimension_semantics = [#tpu.dimension_semantics<parallel>, #tpu.dimension_semantics<parallel>], iteration_bounds = array<i64: 2, 1>, scalar_prefetch = 0 : i64, scratch_operands = 1 : i64, tpu.core_type = #tpu.core_type<tc>, window_params = [{transform_indices = @transform_0, window_bounds = array<i64: 1, 18, 18, 4>}, {pipeline_mode = #tpu.pipeline_mode<synchronous>, transform_indices = @transform_1, window_bounds = array<i64: 4, 4>}, {pipeline_mode = #tpu.pipeline_mode<synchronous>, transform_indices = @transform_2, window_bounds = array<i64: 1, 4>}, {pipeline_mode = #tpu.pipeline_mode<synchronous>, transform_indices = @transform_3, window_bounds = array<i64: 36, 4>}, {pipeline_mode = #tpu.pipeline_mode<synchronous>, transform_indices = @transform_4, window_bounds = array<i64: 1, 4>}, {pipeline_mode = #tpu.pipeline_mode<synchronous>, transform_indices = @transform_5, window_bounds = array<i64: 4, 16>}, {pipeline_mode = #tpu.pipeline_mode<synchronous>, transform_indices = @transform_6, window_bounds = array<i64: 1, 16>}, {pipeline_mode = #tpu.pipeline_mode<synchronous>, transform_indices = @transform_7, window_bounds = array<i64: 4, 16>}, {pipeline_mode = #tpu.pipeline_mode<synchronous>, transform_indices = @transform_8, window_bounds = array<i64: 1, 16>}, {transform_indices = @transform_9, window_bounds = array<i64: 1, 64, 16>}]} {
    %c16_i32 = arith.constant 16 : i32
    %0 = arith.muli %arg1, %c16_i32 : i32
    %1 = tpu.assume_multiple %0, 16 : i32
    %c0 = arith.constant 0 : index
    %2 = arith.index_cast %1 : i32 to index
    %c0_0 = arith.constant 0 : index
    %c0_1 = arith.constant 0 : index
    %3 = vector.load %arg2[%c0, %2, %c0_0, %c0_1] : memref<1x18x18x4xf32, #tpu.memory_space<vmem>>, vector<1x18x18x4xf32>
    %4 = vector.shape_cast %3 : vector<1x18x18x4xf32> to vector<18x18x4xf32>
    %5 = vector.shape_cast %4 : vector<18x18x4xf32> to vector<324x4xf32>
    %c0_2 = arith.constant 0 : index
    %c0_3 = arith.constant 0 : index
    %6 = vector.load %arg3[%c0_2, %c0_3] : memref<4x4xf32, #tpu.memory_space<vmem>>, vector<4x4xf32>
    %cst = arith.constant dense<0.000000e+00> : vector<324x4xf32>
    %7 = tpu.matmul %5, %6, %cst {dimension_numbers = #tpu.dot_dimension_numbers<[1], [0], [0], [1], [0, 0, 1, 1], [], []>} : vector<324x4xf32>, vector<4x4xf32>, vector<324x4xf32> -> vector<324x4xf32>
    %c0_4 = arith.constant 0 : index
    %c0_5 = arith.constant 0 : index
    %8 = vector.load %arg4[%c0_4, %c0_5] : memref<1x4xf32, #tpu.memory_space<vmem>>, vector<1x4xf32>
    %9 = vector.broadcast %8 : vector<1x4xf32> to vector<324x4xf32>
    %10 = arith.addf %7, %9 : vector<324x4xf32>
    %cst_6 = arith.constant 0.000000e+00 : f32
    %11 = vector.broadcast %cst_6 : f32 to vector<324x4xf32>
    %12 = arith.maximumf %10, %11 : vector<324x4xf32>
    %13 = vector.shape_cast %12 : vector<324x4xf32> to vector<18x18x4xf32>
    %14 = tpu.iota {dimensions = array<i32: 0>} : vector<18x18x4xi32>
    %15 = vector.broadcast %1 : i32 to vector<18x18x4xi32>
    %16 = arith.addi %14, %15 : vector<18x18x4xi32>
    %17 = tpu.iota {dimensions = array<i32: 1>} : vector<18x18x4xi32>
    %c1_i32 = arith.constant 1 : i32
    %18 = vector.broadcast %c1_i32 : i32 to vector<18x18x4xi32>
    %19 = arith.cmpi sge, %16, %18 : vector<18x18x4xi32>
    %c16_i32_7 = arith.constant 16 : i32
    %20 = vector.broadcast %c16_i32_7 : i32 to vector<18x18x4xi32>
    %21 = arith.cmpi sle, %16, %20 : vector<18x18x4xi32>
    %22 = arith.andi %19, %21 : vector<18x18x4xi1>
    %c1_i32_8 = arith.constant 1 : i32
    %23 = vector.broadcast %c1_i32_8 : i32 to vector<18x18x4xi32>
    %24 = arith.cmpi sge, %17, %23 : vector<18x18x4xi32>
    %25 = arith.andi %22, %24 : vector<18x18x4xi1>
    %c16_i32_9 = arith.constant 16 : i32
    %26 = vector.broadcast %c16_i32_9 : i32 to vector<18x18x4xi32>
    %27 = arith.cmpi sle, %17, %26 : vector<18x18x4xi32>
    %28 = arith.andi %25, %27 : vector<18x18x4xi1>
    %cst_10 = arith.constant 0.000000e+00 : f32
    %29 = vector.broadcast %cst_10 : f32 to vector<18x18x4xf32>
    %30 = arith.select %28, %13, %29 : vector<18x18x4xi1>, vector<18x18x4xf32>
    %c0_11 = arith.constant 0 : index
    %c0_12 = arith.constant 0 : index
    %c0_13 = arith.constant 0 : index
    %31 = vector.load %arg12[%c0_11, %c0_12, %c0_13] : memref<18x18x4xf32, #tpu.memory_space<vmem>>, vector<18x18x4xf32>
    tpu.vector_store %arg12[%c0_11, %c0_12, %c0_13], %30 {strides = array<i32>} : memref<18x18x4xf32, #tpu.memory_space<vmem>>, vector<18x18x4xf32>,
    %c0_14 = arith.constant 0 : index
    %c0_15 = arith.constant 0 : index
    %c0_16 = arith.constant 0 : index
    %32 = tpu.strided_load %arg12[%c0_14, %c0_15, %c0_16] {strides = array<i32: 1, 2, 1>} : memref<18x18x4xf32, #tpu.memory_space<vmem>>, vector<16x8x4xf32>
    %33 = vector.shape_cast %32 : vector<16x8x4xf32> to vector<8x2x8x4xf32>
    %34 = vector.extract_strided_slice %33 {offsets = [0, 0, 0, 0], sizes = [8, 1, 8, 4], strides = [1, 1, 1, 1]} : vector<8x2x8x4xf32> to vector<8x1x8x4xf32>
    %35 = vector.shape_cast %34 : vector<8x1x8x4xf32> to vector<8x8x4xf32>
    %36 = vector.shape_cast %35 : vector<8x8x4xf32> to vector<64x4xf32>
    %c0_17 = arith.constant 0 : index
    %c1 = arith.constant 1 : index
    %c0_18 = arith.constant 0 : index
    %37 = tpu.strided_load %arg12[%c0_17, %c1, %c0_18] {strides = array<i32: 1, 2, 1>} : memref<18x18x4xf32, #tpu.memory_space<vmem>>, vector<16x8x4xf32>
    %38 = vector.shape_cast %37 : vector<16x8x4xf32> to vector<8x2x8x4xf32>
    %39 = vector.extract_strided_slice %38 {offsets = [0, 0, 0, 0], sizes = [8, 1, 8, 4], strides = [1, 1, 1, 1]} : vector<8x2x8x4xf32> to vector<8x1x8x4xf32>
    %40 = vector.shape_cast %39 : vector<8x1x8x4xf32> to vector<8x8x4xf32>
    %41 = vector.shape_cast %40 : vector<8x8x4xf32> to vector<64x4xf32>
    %c0_19 = arith.constant 0 : index
    %c2 = arith.constant 2 : index
    %c0_20 = arith.constant 0 : index
    %42 = tpu.strided_load %arg12[%c0_19, %c2, %c0_20] {strides = array<i32: 1, 2, 1>} : memref<18x18x4xf32, #tpu.memory_space<vmem>>, vector<16x8x4xf32>
    %43 = vector.shape_cast %42 : vector<16x8x4xf32> to vector<8x2x8x4xf32>
    %44 = vector.extract_strided_slice %43 {offsets = [0, 0, 0, 0], sizes = [8, 1, 8, 4], strides = [1, 1, 1, 1]} : vector<8x2x8x4xf32> to vector<8x1x8x4xf32>
    %45 = vector.shape_cast %44 : vector<8x1x8x4xf32> to vector<8x8x4xf32>
    %46 = vector.shape_cast %45 : vector<8x8x4xf32> to vector<64x4xf32>
    %c1_21 = arith.constant 1 : index
    %c0_22 = arith.constant 0 : index
    %c0_23 = arith.constant 0 : index
    %47 = tpu.strided_load %arg12[%c1_21, %c0_22, %c0_23] {strides = array<i32: 1, 2, 1>} : memref<18x18x4xf32, #tpu.memory_space<vmem>>, vector<16x8x4xf32>
    %48 = vector.shape_cast %47 : vector<16x8x4xf32> to vector<8x2x8x4xf32>
    %49 = vector.extract_strided_slice %48 {offsets = [0, 0, 0, 0], sizes = [8, 1, 8, 4], strides = [1, 1, 1, 1]} : vector<8x2x8x4xf32> to vector<8x1x8x4xf32>
    %50 = vector.shape_cast %49 : vector<8x1x8x4xf32> to vector<8x8x4xf32>
    %51 = vector.shape_cast %50 : vector<8x8x4xf32> to vector<64x4xf32>
    %c1_24 = arith.constant 1 : index
    %c1_25 = arith.constant 1 : index
    %c0_26 = arith.constant 0 : index
    %52 = tpu.strided_load %arg12[%c1_24, %c1_25, %c0_26] {strides = array<i32: 1, 2, 1>} : memref<18x18x4xf32, #tpu.memory_space<vmem>>, vector<16x8x4xf32>
    %53 = vector.shape_cast %52 : vector<16x8x4xf32> to vector<8x2x8x4xf32>
    %54 = vector.extract_strided_slice %53 {offsets = [0, 0, 0, 0], sizes = [8, 1, 8, 4], strides = [1, 1, 1, 1]} : vector<8x2x8x4xf32> to vector<8x1x8x4xf32>
    %55 = vector.shape_cast %54 : vector<8x1x8x4xf32> to vector<8x8x4xf32>
    %56 = vector.shape_cast %55 : vector<8x8x4xf32> to vector<64x4xf32>
    %c1_27 = arith.constant 1 : index
    %c2_28 = arith.constant 2 : index
    %c0_29 = arith.constant 0 : index
    %57 = tpu.strided_load %arg12[%c1_27, %c2_28, %c0_29] {strides = array<i32: 1, 2, 1>} : memref<18x18x4xf32, #tpu.memory_space<vmem>>, vector<16x8x4xf32>
    %58 = vector.shape_cast %57 : vector<16x8x4xf32> to vector<8x2x8x4xf32>
    %59 = vector.extract_strided_slice %58 {offsets = [0, 0, 0, 0], sizes = [8, 1, 8, 4], strides = [1, 1, 1, 1]} : vector<8x2x8x4xf32> to vector<8x1x8x4xf32>
    %60 = vector.shape_cast %59 : vector<8x1x8x4xf32> to vector<8x8x4xf32>
    %61 = vector.shape_cast %60 : vector<8x8x4xf32> to vector<64x4xf32>
    %c2_30 = arith.constant 2 : index
    %c0_31 = arith.constant 0 : index
    %c0_32 = arith.constant 0 : index
    %62 = tpu.strided_load %arg12[%c2_30, %c0_31, %c0_32] {strides = array<i32: 1, 2, 1>} : memref<18x18x4xf32, #tpu.memory_space<vmem>>, vector<16x8x4xf32>
    %63 = vector.shape_cast %62 : vector<16x8x4xf32> to vector<8x2x8x4xf32>
    %64 = vector.extract_strided_slice %63 {offsets = [0, 0, 0, 0], sizes = [8, 1, 8, 4], strides = [1, 1, 1, 1]} : vector<8x2x8x4xf32> to vector<8x1x8x4xf32>
    %65 = vector.shape_cast %64 : vector<8x1x8x4xf32> to vector<8x8x4xf32>
    %66 = vector.shape_cast %65 : vector<8x8x4xf32> to vector<64x4xf32>
    %c2_33 = arith.constant 2 : index
    %c1_34 = arith.constant 1 : index
    %c0_35 = arith.constant 0 : index
    %67 = tpu.strided_load %arg12[%c2_33, %c1_34, %c0_35] {strides = array<i32: 1, 2, 1>} : memref<18x18x4xf32, #tpu.memory_space<vmem>>, vector<16x8x4xf32>
    %68 = vector.shape_cast %67 : vector<16x8x4xf32> to vector<8x2x8x4xf32>
    %69 = vector.extract_strided_slice %68 {offsets = [0, 0, 0, 0], sizes = [8, 1, 8, 4], strides = [1, 1, 1, 1]} : vector<8x2x8x4xf32> to vector<8x1x8x4xf32>
    %70 = vector.shape_cast %69 : vector<8x1x8x4xf32> to vector<8x8x4xf32>
    %71 = vector.shape_cast %70 : vector<8x8x4xf32> to vector<64x4xf32>
    %c2_36 = arith.constant 2 : index
    %c2_37 = arith.constant 2 : index
    %c0_38 = arith.constant 0 : index
    %72 = tpu.strided_load %arg12[%c2_36, %c2_37, %c0_38] {strides = array<i32: 1, 2, 1>} : memref<18x18x4xf32, #tpu.memory_space<vmem>>, vector<16x8x4xf32>
    %73 = vector.shape_cast %72 : vector<16x8x4xf32> to vector<8x2x8x4xf32>
    %74 = vector.extract_strided_slice %73 {offsets = [0, 0, 0, 0], sizes = [8, 1, 8, 4], strides = [1, 1, 1, 1]} : vector<8x2x8x4xf32> to vector<8x1x8x4xf32>
    %75 = vector.shape_cast %74 : vector<8x1x8x4xf32> to vector<8x8x4xf32>
    %76 = vector.shape_cast %75 : vector<8x8x4xf32> to vector<64x4xf32>
    %77 = tpu.concatenate %36, %41, %46, %51, %56, %61, %66, %71, %76 in 1 : vector<64x4xf32>, vector<64x4xf32>, vector<64x4xf32>, vector<64x4xf32>, vector<64x4xf32>, vector<64x4xf32>, vector<64x4xf32>, vector<64x4xf32>, vector<64x4xf32> -> vector<64x36xf32>
    %c0_39 = arith.constant 0 : index
    %c0_40 = arith.constant 0 : index
    %78 = vector.load %arg5[%c0_39, %c0_40] : memref<36x4xf32, #tpu.memory_space<vmem>>, vector<36x4xf32>
    %cst_41 = arith.constant dense<0.000000e+00> : vector<64x4xf32>
    %79 = tpu.matmul %77, %78, %cst_41 {dimension_numbers = #tpu.dot_dimension_numbers<[1], [0], [0], [1], [0, 0, 1, 1], [], []>} : vector<64x36xf32>, vector<36x4xf32>, vector<64x4xf32> -> vector<64x4xf32>
    %c0_42 = arith.constant 0 : index
    %c0_43 = arith.constant 0 : index
    %80 = vector.load %arg6[%c0_42, %c0_43] : memref<1x4xf32, #tpu.memory_space<vmem>>, vector<1x4xf32>
    %81 = vector.broadcast %80 : vector<1x4xf32> to vector<64x4xf32>
    %82 = arith.addf %79, %81 : vector<64x4xf32>
    %cst_44 = arith.constant 0.000000e+00 : f32
    %83 = vector.broadcast %cst_44 : f32 to vector<64x4xf32>
    %84 = arith.maximumf %82, %83 : vector<64x4xf32>
    %c0_45 = arith.constant 0 : index
    %c0_46 = arith.constant 0 : index
    %85 = vector.load %arg7[%c0_45, %c0_46] : memref<4x16xf32, #tpu.memory_space<vmem>>, vector<4x16xf32>
    %cst_47 = arith.constant dense<0.000000e+00> : vector<64x16xf32>
    %86 = tpu.matmul %84, %85, %cst_47 {dimension_numbers = #tpu.dot_dimension_numbers<[1], [0], [0], [1], [0, 0, 1, 1], [], []>} : vector<64x4xf32>, vector<4x16xf32>, vector<64x16xf32> -> vector<64x16xf32>
    %c0_48 = arith.constant 0 : index
    %c0_49 = arith.constant 0 : index
    %87 = vector.load %arg8[%c0_48, %c0_49] : memref<1x16xf32, #tpu.memory_space<vmem>>, vector<1x16xf32>
    %88 = vector.broadcast %87 : vector<1x16xf32> to vector<64x16xf32>
    %89 = arith.addf %86, %88 : vector<64x16xf32>
    %c1_i32_50 = arith.constant 1 : i32
    %90 = arith.addi %1, %c1_i32_50 : i32
    %c0_51 = arith.constant 0 : index
    %91 = arith.index_cast %90 : i32 to index
    %c1_52 = arith.constant 1 : index
    %c0_53 = arith.constant 0 : index
    %92 = tpu.strided_load %arg2[%c0_51, %91, %c1_52, %c0_53] {strides = array<i32: 1, 1, 2, 1>} : memref<1x18x18x4xf32, #tpu.memory_space<vmem>>, vector<1x16x8x4xf32>
    %93 = vector.shape_cast %92 : vector<1x16x8x4xf32> to vector<16x8x4xf32>
    %94 = vector.shape_cast %93 : vector<16x8x4xf32> to vector<8x2x8x4xf32>
    %95 = vector.extract_strided_slice %94 {offsets = [0, 0, 0, 0], sizes = [8, 1, 8, 4], strides = [1, 1, 1, 1]} : vector<8x2x8x4xf32> to vector<8x1x8x4xf32>
    %96 = vector.shape_cast %95 : vector<8x1x8x4xf32> to vector<8x8x4xf32>
    %97 = vector.shape_cast %96 : vector<8x8x4xf32> to vector<64x4xf32>
    %c0_54 = arith.constant 0 : index
    %c0_55 = arith.constant 0 : index
    %98 = vector.load %arg9[%c0_54, %c0_55] : memref<4x16xf32, #tpu.memory_space<vmem>>, vector<4x16xf32>
    %cst_56 = arith.constant dense<0.000000e+00> : vector<64x16xf32>
    %99 = tpu.matmul %97, %98, %cst_56 {dimension_numbers = #tpu.dot_dimension_numbers<[1], [0], [0], [1], [0, 0, 1, 1], [], []>} : vector<64x4xf32>, vector<4x16xf32>, vector<64x16xf32> -> vector<64x16xf32>
    %c0_57 = arith.constant 0 : index
    %c0_58 = arith.constant 0 : index
    %100 = vector.load %arg10[%c0_57, %c0_58] : memref<1x16xf32, #tpu.memory_space<vmem>>, vector<1x16xf32>
    %101 = vector.broadcast %100 : vector<1x16xf32> to vector<64x16xf32>
    %102 = arith.addf %99, %101 : vector<64x16xf32>
    %103 = arith.addf %89, %102 : vector<64x16xf32>
    %cst_59 = arith.constant 0.000000e+00 : f32
    %104 = vector.broadcast %cst_59 : f32 to vector<64x16xf32>
    %105 = arith.maximumf %103, %104 : vector<64x16xf32>
    %c0_60 = arith.constant 0 : index
    %c0_61 = arith.constant 0 : index
    %c0_62 = arith.constant 0 : index
    %106 = vector.load %arg11[%c0_60, %c0_61, %c0_62] : memref<1x64x16xf32, #tpu.memory_space<vmem>>, vector<1x64x16xf32>
    %107 = vector.shape_cast %106 : vector<1x64x16xf32> to vector<64x16xf32>
    %108 = vector.shape_cast %105 : vector<64x16xf32> to vector<1x64x16xf32>
    tpu.vector_store %arg11[%c0_60, %c0_61, %c0_62], %108 {strides = array<i32>} : memref<1x64x16xf32, #tpu.memory_space<vmem>>, vector<1x64x16xf32>,
    return
  }
  func.func @transform_0(%arg0: i32, %arg1: i32) -> (i32, i32, i32, i32) {
    %c0_i32 = arith.constant 0 : i32
    %c0_i32_0 = arith.constant 0 : i32
    %c0_i32_1 = arith.constant 0 : i32
    %c0_i32_2 = arith.constant 0 : i32
    return %arg0, %c0_i32, %c0_i32_0, %c0_i32_1 : i32, i32, i32, i32
  }
  func.func @transform_1(%arg0: i32, %arg1: i32) -> (i32, i32) {
    %c0_i32 = arith.constant 0 : i32
    %c0_i32_0 = arith.constant 0 : i32
    %c0_i32_1 = arith.constant 0 : i32
    return %c0_i32, %c0_i32_0 : i32, i32
  }
  func.func @transform_2(%arg0: i32, %arg1: i32) -> (i32, i32) {
    %c0_i32 = arith.constant 0 : i32
    %c0_i32_0 = arith.constant 0 : i32
    %c0_i32_1 = arith.constant 0 : i32
    return %c0_i32, %c0_i32_0 : i32, i32
  }
  func.func @transform_3(%arg0: i32, %arg1: i32) -> (i32, i32) {
    %c0_i32 = arith.constant 0 : i32
    %c0_i32_0 = arith.constant 0 : i32
    %c0_i32_1 = arith.constant 0 : i32
    return %c0_i32, %c0_i32_0 : i32, i32
  }
  func.func @transform_4(%arg0: i32, %arg1: i32) -> (i32, i32) {
    %c0_i32 = arith.constant 0 : i32
    %c0_i32_0 = arith.constant 0 : i32
    %c0_i32_1 = arith.constant 0 : i32
    return %c0_i32, %c0_i32_0 : i32, i32
  }
  func.func @transform_5(%arg0: i32, %arg1: i32) -> (i32, i32) {
    %c0_i32 = arith.constant 0 : i32
    %c0_i32_0 = arith.constant 0 : i32
    %c0_i32_1 = arith.constant 0 : i32
    return %c0_i32, %c0_i32_0 : i32, i32
  }
  func.func @transform_6(%arg0: i32, %arg1: i32) -> (i32, i32) {
    %c0_i32 = arith.constant 0 : i32
    %c0_i32_0 = arith.constant 0 : i32
    %c0_i32_1 = arith.constant 0 : i32
    return %c0_i32, %c0_i32_0 : i32, i32
  }
  func.func @transform_7(%arg0: i32, %arg1: i32) -> (i32, i32) {
    %c0_i32 = arith.constant 0 : i32
    %c0_i32_0 = arith.constant 0 : i32
    %c0_i32_1 = arith.constant 0 : i32
    return %c0_i32, %c0_i32_0 : i32, i32
  }
  func.func @transform_8(%arg0: i32, %arg1: i32) -> (i32, i32) {
    %c0_i32 = arith.constant 0 : i32
    %c0_i32_0 = arith.constant 0 : i32
    %c0_i32_1 = arith.constant 0 : i32
    return %c0_i32, %c0_i32_0 : i32, i32
  }
  func.func @transform_9(%arg0: i32, %arg1: i32) -> (i32, i32, i32) {
    %c0_i32 = arith.constant 0 : i32
    %c0_i32_0 = arith.constant 0 : i32
    return %arg0, %arg1, %c0_i32 : i32, i32, i32
  }
}

</mosaic_0001>

<llo_original>
// kernel: bottleneck_forward.1
$region0: #{bottleneck_forward.1}
  #allocation0 [shape = 'u32[]', space=smem, size = 0x4, offset = 0x4, fixed_abs, tag = 'smem constant byte address 0x4 - core index']
  #allocation1 [shape = 'u32[72,128]{1,0:T(1,128)}', space=vmem, size = 0x9000, scoped, tag = 'internal scratch']
  #allocation2 [shape = 'f32[18,18,4]{2,1,0:T(8,128)}', space=vmem, size = 0x36000, scoped, tag = 'scratch operand']
  %s0 = inlined_call_operand.vmem [shape: f32[2,18,18,4], index: 0, kind: input, shape index: {}]
  %s1 = inlined_call_operand.vmem [shape: f32[4,4], index: 1, kind: input, shape index: {}]
  %s2 = inlined_call_operand.vmem [shape: f32[1,4], index: 2, kind: input, shape index: {}]
  %s3 = inlined_call_operand.vmem [shape: f32[36,4], index: 3, kind: input, shape index: {}]
  %s4 = inlined_call_operand.vmem [shape: f32[1,4], index: 4, kind: input, shape index: {}]
  %s5 = inlined_call_operand.vmem [shape: f32[4,16], index: 5, kind: input, shape index: {}]
  %s6 = inlined_call_operand.vmem [shape: f32[1,16], index: 6, kind: input, shape index: {}]
  %s7 = inlined_call_operand.vmem [shape: f32[4,16], index: 7, kind: input, shape index: {}]
  %s8 = inlined_call_operand.vmem [shape: f32[1,16], index: 8, kind: input, shape index: {}]
  %s9 = inlined_call_operand.hbm [shape: f32[2,64,16], index: 9, kind: output, shape index: {}]
  %s10 = sld [smem:[#allocation0]]
  $region69: #{bottleneck_forward.1} parent=0
    _
  %s12 = ssub.s32 1, %s10
  %s13 = scalar_select 0, %s12, %s10
  $region1: #{bottleneck_forward.1} parent=0
    #allocation3 [shape = 'u8[65536]{0}', space=vmem, size = 0x10000, scoped, tag = 'output window, operand 0']
    #allocation4 [shape = 's32[2]{0}', space=sflag, size = 0x8, scoped, tag = 'scoped memory for bottleneck_forward.1']
    %14 = vsyncpa [#allocation4], 0
    %s15 = scalar_lea.sflag [#allocation4], 1
    %16 = vsyncpa %s15, 0
    loop: start=0, step=1, limit=4
    $region2: #{bottleneck_forward.1} parent=1 // loop_pre_header
      _
    $region3: #{bottleneck_forward.1} parent=1 // loop_header
      %s18 = sphi 0, %s22
      %p19 = scmp.ge.s32.totalorder %s18, 4
      %s25 = sphi 0, %s37
      %s26 = sphi 0, %s33
      %s27 = sphi 0, %s25
      %s28 = sphi 0, %s26
      %s29 = sphi 0, %s27
      %s30 = sphi 0, %s28
      %s40 = sphi 0, %s42
      %s43 = sphi 0, %s40
      %s44 = sphi 0, %s43
      %s60 = sphi 0, %s44
      %s64 = sphi 0, %s64
      %s66 = sphi 0, %s64
      %s67 = sphi 0, %s66
      %s81 = sphi 0, %s67
      %s85 = sphi 0, %s85
      %s87 = sphi 0, %s85
      %s88 = sphi 0, %s87
      %s102 = sphi 0, %s88
      %s106 = sphi 0, %s106
      %s108 = sphi 0, %s106
      %s109 = sphi 0, %s108
      %s123 = sphi 0, %s109
      %s127 = sphi 0, %s127
      %s129 = sphi 0, %s127
      %s130 = sphi 0, %s129
      %s144 = sphi 0, %s130
      %s148 = sphi 0, %s148
      %s150 = sphi 0, %s148
      %s151 = sphi 0, %s150
      %s165 = sphi 0, %s151
      %s169 = sphi 0, %s169
      %s171 = sphi 0, %s169
      %s172 = sphi 0, %s171
      %s186 = sphi 0, %s172
      %s190 = sphi 0, %s190
      %s192 = sphi 0, %s190
      %s193 = sphi 0, %s192
      %s207 = sphi 0, %s193
      %s211 = sphi 0, %s211
      %s213 = sphi 0, %s211
      %s214 = sphi 0, %s213
      %s228 = sphi 0, %s214
      %s236 = sphi 0, %s238
      %s239 = sphi 0, %s236
      %s240 = sphi 0, %s239
      %s256 = sphi 0, %s240
    $region4: #{bottleneck_forward.1} parent=1 // loop_header_branch
      %21 = sbr.rel (%p19) target = $region8
    $region5: #{bottleneck_forward.1} parent=1 // loop_body
      %s23 = ssub.s32 %s18, 1
      %s24 = ssub.s32 %s18, 2
      %s31 = sadd.s32 1, %s26
      %p32 = scmp.ge.s32.totalorder %s31, 1
      %s33 = scalar_select %p32, 0, %s31
      %s34 = sadd.s32 1, %s25
      %s35 = scalar_select %p32, %s34, %s25
      %p36 = scmp.ge.s32.totalorder %s35, 2
      %s37 = scalar_select %p36, 0, %s35
      %s38 = ssub.s32 %s25, %s37
      %p39 = scmp.eq.s32.totalorder %s38, 0
      %s41 = sadd.s32 %s40, 1
      %s42 = scalar_select %p39, %s40, %s41
      %p45 = pneg %p39
      %p46 = scmp.eq.s32.totalorder %s18, 1
      %p47 = por %p45, %p46
      %p48 = scmp.ne.s32.totalorder %s40, %s43
      %p49 = scmp.eq.s32.totalorder %s18, 0
      %p50 = por %p48, %p49
      %p51 = scmp.ne.s32.totalorder %s40, %s43
      %p52 = scmp.eq.s32.totalorder %s23, 1
      %p53 = por %p51, %p52
      %p54 = scmp.ne.s32.totalorder %s43, %s44
      %p55 = scmp.eq.s32.totalorder %s23, 0
      %p56 = por %p54, %p55
      %p57 = scmp.ne.s32.totalorder %s43, %s44
      %p58 = scmp.eq.s32.totalorder %s24, 1
      %p59 = por %p57, %p58
      %p61 = scmp.ne.s32.totalorder %s44, %s60
      %p62 = scmp.eq.s32.totalorder %s24, 0
      %p63 = por %p61, %p62
      %s65 = sadd.s32 %s64, 1
      %p68 = scmp.eq.s32.totalorder %s18, 1
      %p69 = scmp.ne.s32.totalorder %s64, %s66
      %p70 = scmp.eq.s32.totalorder %s18, 0
      %p71 = por %p69, %p70
      %p72 = scmp.ne.s32.totalorder %s64, %s66
      %p73 = scmp.eq.s32.totalorder %s23, 1
      %p74 = por %p72, %p73
      %p75 = scmp.ne.s32.totalorder %s66, %s67
      %p76 = scmp.eq.s32.totalorder %s23, 0
      %p77 = por %p75, %p76
      %p78 = scmp.ne.s32.totalorder %s66, %s67
      %p79 = scmp.eq.s32.totalorder %s24, 1
      %p80 = por %p78, %p79
      %p82 = scmp.ne.s32.totalorder %s67, %s81
      %p83 = scmp.eq.s32.totalorder %s24, 0
      %p84 = por %p82, %p83
      %s86 = sadd.s32 %s85, 1
      %p89 = scmp.eq.s32.totalorder %s18, 1
      %p90 = scmp.ne.s32.totalorder %s85, %s87
      %p91 = scmp.eq.s32.totalorder %s18, 0
      %p92 = por %p90, %p91
      %p93 = scmp.ne.s32.totalorder %s85, %s87
      %p94 = scmp.eq.s32.totalorder %s23, 1
      %p95 = por %p93, %p94
      %p96 = scmp.ne.s32.totalorder %s87, %s88
      %p97 = scmp.eq.s32.totalorder %s23, 0
      %p98 = por %p96, %p97
      %p99 = scmp.ne.s32.totalorder %s87, %s88
      %p100 = scmp.eq.s32.totalorder %s24, 1
      %p101 = por %p99, %p100
      %p103 = scmp.ne.s32.totalorder %s88, %s102
      %p104 = scmp.eq.s32.totalorder %s24, 0
      %p105 = por %p103, %p104
      %s107 = sadd.s32 %s106, 1
      %p110 = scmp.eq.s32.totalorder %s18, 1
      %p111 = scmp.ne.s32.totalorder %s106, %s108
      %p112 = scmp.eq.s32.totalorder %s18, 0
      %p113 = por %p111, %p112
      %p114 = scmp.ne.s32.totalorder %s106, %s108
      %p115 = scmp.eq.s32.totalorder %s23, 1
      %p116 = por %p114, %p115
      %p117 = scmp.ne.s32.totalorder %s108, %s109
      %p118 = scmp.eq.s32.totalorder %s23, 0
      %p119 = por %p117, %p118
      %p120 = scmp.ne.s32.totalorder %s108, %s109
      %p121 = scmp.eq.s32.totalorder %s24, 1
      %p122 = por %p120, %p121
      %p124 = scmp.ne.s32.totalorder %s109, %s123
      %p125 = scmp.eq.s32.totalorder %s24, 0
      %p126 = por %p124, %p125
      %s128 = sadd.s32 %s127, 1
      %p131 = scmp.eq.s32.totalorder %s18, 1
      %p132 = scmp.ne.s32.totalorder %s127, %s129
      %p133 = scmp.eq.s32.totalorder %s18, 0
      %p134 = por %p132, %p133
      %p135 = scmp.ne.s32.totalorder %s127, %s129
      %p136 = scmp.eq.s32.totalorder %s23, 1
      %p137 = por %p135, %p136
      %p138 = scmp.ne.s32.totalorder %s129, %s130
      %p139 = scmp.eq.s32.totalorder %s23, 0
      %p140 = por %p138, %p139
      %p141 = scmp.ne.s32.totalorder %s129, %s130
      %p142 = scmp.eq.s32.totalorder %s24, 1
      %p143 = por %p141, %p142
      %p145 = scmp.ne.s32.totalorder %s130, %s144
      %p146 = scmp.eq.s32.totalorder %s24, 0
      %p147 = por %p145, %p146
      %s149 = sadd.s32 %s148, 1
      %p152 = scmp.eq.s32.totalorder %s18, 1
      %p153 = scmp.ne.s32.totalorder %s148, %s150
      %p154 = scmp.eq.s32.totalorder %s18, 0
      %p155 = por %p153, %p154
      %p156 = scmp.ne.s32.totalorder %s148, %s150
      %p157 = scmp.eq.s32.totalorder %s23, 1
      %p158 = por %p156, %p157
      %p159 = scmp.ne.s32.totalorder %s150, %s151
      %p160 = scmp.eq.s32.totalorder %s23, 0
      %p161 = por %p159, %p160
      %p162 = scmp.ne.s32.totalorder %s150, %s151
      %p163 = scmp.eq.s32.totalorder %s24, 1
      %p164 = por %p162, %p163
      %p166 = scmp.ne.s32.totalorder %s151, %s165
      %p167 = scmp.eq.s32.totalorder %s24, 0
      %p168 = por %p166, %p167
      %s170 = sadd.s32 %s169, 1
      %p173 = scmp.eq.s32.totalorder %s18, 1
      %p174 = scmp.ne.s32.totalorder %s169, %s171
      %p175 = scmp.eq.s32.totalorder %s18, 0
      %p176 = por %p174, %p175
      %p177 = scmp.ne.s32.totalorder %s169, %s171
      %p178 = scmp.eq.s32.totalorder %s23, 1
      %p179 = por %p177, %p178
      %p180 = scmp.ne.s32.totalorder %s171, %s172
      %p181 = scmp.eq.s32.totalorder %s23, 0
      %p182 = por %p180, %p181
      %p183 = scmp.ne.s32.totalorder %s171, %s172
      %p184 = scmp.eq.s32.totalorder %s24, 1
      %p185 = por %p183, %p184
      %p187 = scmp.ne.s32.totalorder %s172, %s186
      %p188 = scmp.eq.s32.totalorder %s24, 0
      %p189 = por %p187, %p188
      %s191 = sadd.s32 %s190, 1
      %p194 = scmp.eq.s32.totalorder %s18, 1
      %p195 = scmp.ne.s32.totalorder %s190, %s192
      %p196 = scmp.eq.s32.totalorder %s18, 0
      %p197 = por %p195, %p196
      %p198 = scmp.ne.s32.totalorder %s190, %s192
      %p199 = scmp.eq.s32.totalorder %s23, 1
      %p200 = por %p198, %p199
      %p201 = scmp.ne.s32.totalorder %s192, %s193
      %p202 = scmp.eq.s32.totalorder %s23, 0
      %p203 = por %p201, %p202
      %p204 = scmp.ne.s32.totalorder %s192, %s193
      %p205 = scmp.eq.s32.totalorder %s24, 1
      %p206 = por %p204, %p205
      %p208 = scmp.ne.s32.totalorder %s193, %s207
      %p209 = scmp.eq.s32.totalorder %s24, 0
      %p210 = por %p208, %p209
      %s212 = sadd.s32 %s211, 1
      %p215 = scmp.eq.s32.totalorder %s18, 1
      %p216 = scmp.ne.s32.totalorder %s211, %s213
      %p217 = scmp.eq.s32.totalorder %s18, 0
      %p218 = por %p216, %p217
      %p219 = scmp.ne.s32.totalorder %s211, %s213
      %p220 = scmp.eq.s32.totalorder %s23, 1
      %p221 = por %p219, %p220
      %p222 = scmp.ne.s32.totalorder %s213, %s214
      %p223 = scmp.eq.s32.totalorder %s23, 0
      %p224 = por %p222, %p223
      %p225 = scmp.ne.s32.totalorder %s213, %s214
      %p226 = scmp.eq.s32.totalorder %s24, 1
      %p227 = por %p225, %p226
      %p229 = scmp.ne.s32.totalorder %s214, %s228
      %p230 = scmp.eq.s32.totalorder %s24, 0
      %p231 = por %p229, %p230
      %s232 = ssub.s32 %s25, %s37
      %s233 = ssub.s32 %s26, %s33
      %s234 = sor.u32 %s232, %s233
      %p235 = scmp.eq.s32.totalorder %s234, 0
      %s237 = sadd.s32 %s236, 1
      %s238 = scalar_select %p235, %s236, %s237
      %p241 = pneg %p235
      %p242 = scmp.eq.s32.totalorder %s18, 1
      %p243 = por %p241, %p242
      %p244 = scmp.ne.s32.totalorder %s236, %s239
      %p245 = scmp.eq.s32.totalorder %s18, 0
      %p246 = por %p244, %p245
      %p247 = scmp.ne.s32.totalorder %s236, %s239
      %p248 = scmp.eq.s32.totalorder %s23, 1
      %p249 = por %p247, %p248
      %p250 = scmp.ne.s32.totalorder %s239, %s240
      %p251 = scmp.eq.s32.totalorder %s23, 0
      %p252 = por %p250, %p251
      %p253 = scmp.ne.s32.totalorder %s239, %s240
      %p254 = scmp.eq.s32.totalorder %s24, 1
      %p255 = por %p253, %p254
      %p257 = scmp.ne.s32.totalorder %s240, %s256
      %p258 = scmp.eq.s32.totalorder %s24, 0
      %p259 = por %p257, %p258
      %p260 = scmp.le.s32.totalorder 1, %s18
      %p261 = scmp.lt.s32.totalorder %s18, 3
      %p262 = pnand %p260, %p261
      %p263 = pneg %p262
      // Predicated region
      $region9: #{bottleneck_forward.1} parent=5 // pred_check
        _
      $region10: #{bottleneck_forward.1} parent=5 // pred_check_branch
        %265 = sbr.rel (%p262) target = $region12
      $region11: #{bottleneck_forward.1} parent=5 // pred_region
        %s266 = ssub.s32 %s18, 1
        // Predicated region
        $region13: #{bottleneck_forward.1} parent=11 // pred_check
          %p267 = pneg %p77
        $region14: #{bottleneck_forward.1} parent=11 // pred_check_branch
          %269 = sbr.rel (%p267) target = $region16
        $region15: #{bottleneck_forward.1} parent=11 // pred_region
          _
        $region16: #{bottleneck_forward.1} parent=11 // pred_fallthru
          _
        // Predicated region
        $region17: #{bottleneck_forward.1} parent=11 // pred_check
          %p270 = pneg %p98
        $region18: #{bottleneck_forward.1} parent=11 // pred_check_branch
          %272 = sbr.rel (%p270) target = $region20
        $region19: #{bottleneck_forward.1} parent=11 // pred_region
          _
        $region20: #{bottleneck_forward.1} parent=11 // pred_fallthru
          _
        // Predicated region
        $region21: #{bottleneck_forward.1} parent=11 // pred_check
          %p273 = pneg %p119
        $region22: #{bottleneck_forward.1} parent=11 // pred_check_branch
          %275 = sbr.rel (%p273) target = $region24
        $region23: #{bottleneck_forward.1} parent=11 // pred_region
          _
        $region24: #{bottleneck_forward.1} parent=11 // pred_fallthru
          _
        // Predicated region
        $region25: #{bottleneck_forward.1} parent=11 // pred_check
          %p276 = pneg %p140
        $region26: #{bottleneck_forward.1} parent=11 // pred_check_branch
          %278 = sbr.rel (%p276) target = $region28
        $region27: #{bottleneck_forward.1} parent=11 // pred_region
          _
        $region28: #{bottleneck_forward.1} parent=11 // pred_fallthru
          _
        // Predicated region
        $region29: #{bottleneck_forward.1} parent=11 // pred_check
          %p279 = pneg %p161
        $region30: #{bottleneck_forward.1} parent=11 // pred_check_branch
          %281 = sbr.rel (%p279) target = $region32
        $region31: #{bottleneck_forward.1} parent=11 // pred_region
          _
        $region32: #{bottleneck_forward.1} parent=11 // pred_fallthru
          _
        // Predicated region
        $region33: #{bottleneck_forward.1} parent=11 // pred_check
          %p282 = pneg %p182
        $region34: #{bottleneck_forward.1} parent=11 // pred_check_branch
          %284 = sbr.rel (%p282) target = $region36
        $region35: #{bottleneck_forward.1} parent=11 // pred_region
          _
        $region36: #{bottleneck_forward.1} parent=11 // pred_fallthru
          _
        // Predicated region
        $region37: #{bottleneck_forward.1} parent=11 // pred_check
          %p285 = pneg %p203
        $region38: #{bottleneck_forward.1} parent=11 // pred_check_branch
          %287 = sbr.rel (%p285) target = $region40
        $region39: #{bottleneck_forward.1} parent=11 // pred_region
          _
        $region40: #{bottleneck_forward.1} parent=11 // pred_fallthru
          _
        // Predicated region
        $region41: #{bottleneck_forward.1} parent=11 // pred_check
          %p288 = pneg %p224
        $region42: #{bottleneck_forward.1} parent=11 // pred_check_branch
          %290 = sbr.rel (%p288) target = $region44
        $region43: #{bottleneck_forward.1} parent=11 // pred_region
          _
        $region44: #{bottleneck_forward.1} parent=11 // pred_fallthru
          _
      $region12: #{bottleneck_forward.1} parent=5 // pred_fallthru
        _
      %p291 = scmp.lt.s32.totalorder %s18, 2
      // Predicated region
      $region45: #{bottleneck_forward.1} parent=5 // pred_check
        %p292 = pneg %p291
      $region46: #{bottleneck_forward.1} parent=5 // pred_check_branch
        %294 = sbr.rel (%p292) target = $region48
      $region47: #{bottleneck_forward.1} parent=5 // pred_region
        // Predicated region
        $region49: #{bottleneck_forward.1} parent=47 // pred_check
          %p295 = pneg %p50
        $region50: #{bottleneck_forward.1} parent=47 // pred_check_branch
          %297 = sbr.rel (%p295) target = $region52
        $region51: #{bottleneck_forward.1} parent=47 // pred_region
          %p298 = scmp.lt.s32.totalorder %s25, 1
          %s299 = scalar_select %p298, %s25, 1
          %s300 = smul.addr %s299, 54
          %s301 = smul.addr %s300, 8
          %s302 = scalar_lea.vmem %s0, %s301
        $region52: #{bottleneck_forward.1} parent=47 // pred_fallthru
          _
      $region48: #{bottleneck_forward.1} parent=5 // pred_fallthru
        _
      %p303 = scmp.le.s32.totalorder 1, %s18
      %p304 = scmp.lt.s32.totalorder %s18, 3
      %p305 = pnand %p303, %p304
      %p306 = pneg %p305
      // Predicated region
      $region53: #{bottleneck_forward.1} parent=5 // pred_check
        _
      $region54: #{bottleneck_forward.1} parent=5 // pred_check_branch
        %308 = sbr.rel (%p305) target = $region56
      $region55: #{bottleneck_forward.1} parent=5 // pred_region
        %s309 = ssub.s32 %s18, 1
        %p310 = scmp.lt.s32.totalorder %s27, 1
        %s311 = scalar_select %p310, %s27, 1
        %s312 = smul.addr %s311, 54
        %s313 = smul.addr %s312, 8
        %s314 = scalar_lea.vmem %s0, %s313
        %p315 = pneg %p56
        %p316 = pneg %p53
        %p317 = pneg %p77
        %p318 = pneg %p74
        %p319 = pneg %p98
        %p320 = pneg %p95
        %p321 = pneg %p119
        %p322 = pneg %p116
        %p323 = pneg %p140
        %p324 = pneg %p137
        %p325 = pneg %p161
        %p326 = pneg %p158
        %p327 = pneg %p182
        %p328 = pneg %p179
        %p329 = pneg %p203
        %p330 = pneg %p200
        %p331 = pneg %p224
        %p332 = pneg %p221
        %p333 = pneg %p252
        %p334 = pneg %p249
        %s335 = sand.u32 %s239, 1
        %s336 = scalar_lea.sflag [#allocation4], %s335
        %s337 = sand.u32 %s239, 1
        %s338 = smul.addr %s337, 64
        %s339 = scalar_lea.vmem [#allocation3], %s338
        %p340 = scmp.lt.s32.totalorder %s27, 1
        %s341 = scalar_select %p340, %s27, 1
        %s342 = smul.addr %s341, 54
        %s343 = smul.addr %s342, 8
        %s344 = scalar_lea.vmem %s0, %s343
        %s345 = smul.u32 8, %s28
        %s346 = smul.u32 %s28, 16
        %s347 = smul.u32 %s346, 24
        %s348 = scalar_lea.vmem %s344, %s347
        %v349 = vld [vmem:[%s348] sm:$0xff]
        %v350 = vld [vmem:[%s348 + $0x8] sm:$0xff]
        %v351 = vld [vmem:[%s348 + $0x10] sm:$0x3]
        %v352 = vld [vmem:[%s348 + $0x18] sm:$0xff]
        %v353 = vld [vmem:[%s348 + $0x20] sm:$0xff]
        %v354 = vld [vmem:[%s348 + $0x28] sm:$0x3]
        %v355 = vld [vmem:[%s348 + $0x30] sm:$0xff]
        %v356 = vld [vmem:[%s348 + $0x38] sm:$0xff]
        %v357 = vld [vmem:[%s348 + $0x40] sm:$0x3]
        %v358 = vld [vmem:[%s348 + $0x48] sm:$0xff]
        %v359 = vld [vmem:[%s348 + $0x50] sm:$0xff]
        %v360 = vld [vmem:[%s348 + $0x58] sm:$0x3]
        %v361 = vld [vmem:[%s348 + $0x60] sm:$0xff]
        %v362 = vld [vmem:[%s348 + $0x68] sm:$0xff]
        %v363 = vld [vmem:[%s348 + $0x70] sm:$0x3]
        %v364 = vld [vmem:[%s348 + $0x78] sm:$0xff]
        %v365 = vld [vmem:[%s348 + $0x80] sm:$0xff]
        %v366 = vld [vmem:[%s348 + $0x88] sm:$0x3]
        %v367 = vld [vmem:[%s348 + $0x90] sm:$0xff]
        %v368 = vld [vmem:[%s348 + $0x98] sm:$0xff]
        %v369 = vld [vmem:[%s348 + $0xa0] sm:$0x3]
        %v370 = vld [vmem:[%s348 + $0xa8] sm:$0xff]
        %v371 = vld [vmem:[%s348 + $0xb0] sm:$0xff]
        %v372 = vld [vmem:[%s348 + $0xb8] sm:$0x3]
        %v373 = vld [vmem:[%s348 + $0xc0] sm:$0xff]
        %v374 = vld [vmem:[%s348 + $0xc8] sm:$0xff]
        %v375 = vld [vmem:[%s348 + $0xd0] sm:$0x3]
        %v376 = vld [vmem:[%s348 + $0xd8] sm:$0xff]
        %v377 = vld [vmem:[%s348 + $0xe0] sm:$0xff]
        %v378 = vld [vmem:[%s348 + $0xe8] sm:$0x3]
        %v379 = vld [vmem:[%s348 + $0xf0] sm:$0xff]
        %v380 = vld [vmem:[%s348 + $0xf8] sm:$0xff]
        %v381 = vld [vmem:[%s348 + $0x100] sm:$0x3]
        %v382 = vld [vmem:[%s348 + $0x108] sm:$0xff]
        %v383 = vld [vmem:[%s348 + $0x110] sm:$0xff]
        %v384 = vld [vmem:[%s348 + $0x118] sm:$0x3]
        %v385 = vld [vmem:[%s348 + $0x120] sm:$0xff]
        %v386 = vld [vmem:[%s348 + $0x128] sm:$0xff]
        %v387 = vld [vmem:[%s348 + $0x130] sm:$0x3]
        %v388 = vld [vmem:[%s348 + $0x138] sm:$0xff]
        %v389 = vld [vmem:[%s348 + $0x140] sm:$0xff]
        %v390 = vld [vmem:[%s348 + $0x148] sm:$0x3]
        %v391 = vld [vmem:[%s348 + $0x150] sm:$0xff]
        %v392 = vld [vmem:[%s348 + $0x158] sm:$0xff]
        %v393 = vld [vmem:[%s348 + $0x160] sm:$0x3]
        %v394 = vld [vmem:[%s348 + $0x168] sm:$0xff]
        %v395 = vld [vmem:[%s348 + $0x170] sm:$0xff]
        %v396 = vld [vmem:[%s348 + $0x178] sm:$0x3]
        %v397 = vld [vmem:[%s348 + $0x180] sm:$0xff]
        %v398 = vld [vmem:[%s348 + $0x188] sm:$0xff]
        %v399 = vld [vmem:[%s348 + $0x190] sm:$0x3]
        %v400 = vld [vmem:[%s348 + $0x198] sm:$0xff]
        %v401 = vld [vmem:[%s348 + $0x1a0] sm:$0xff]
        %v402 = vld [vmem:[%s348 + $0x1a8] sm:$0x3]
        %v457 = vrot.slane %v349, 2
        %v458 = vrot.slane %v349, 4
        %v459 = vrot.slane %v349, 6
        %v460 = vrot.slane %v350, 2
        %v461 = vrot.slane %v350, 4
        %v462 = vrot.slane %v350, 6
        %v463 = vrot.slane %v352, 2
        %v464 = vrot.slane %v352, 4
        %v465 = vrot.slane %v352, 6
        %v466 = vrot.slane %v353, 2
        %v467 = vrot.slane %v353, 4
        %v468 = vrot.slane %v353, 6
        %v469 = vrot.slane %v355, 2
        %v470 = vrot.slane %v355, 4
        %v471 = vrot.slane %v355, 6
        %v472 = vrot.slane %v356, 2
        %v473 = vrot.slane %v356, 4
        %v474 = vrot.slane %v356, 6
        %v475 = vrot.slane %v358, 2
        %v476 = vrot.slane %v358, 4
        %v477 = vrot.slane %v358, 6
        %v478 = vrot.slane %v359, 2
        %v479 = vrot.slane %v359, 4
        %v480 = vrot.slane %v359, 6
        %v481 = vrot.slane %v361, 2
        %v482 = vrot.slane %v361, 4
        %v483 = vrot.slane %v361, 6
        %v484 = vrot.slane %v362, 2
        %v485 = vrot.slane %v362, 4
        %v486 = vrot.slane %v362, 6
        %v487 = vrot.slane %v364, 2
        %v488 = vrot.slane %v364, 4
        %v489 = vrot.slane %v364, 6
        %v490 = vrot.slane %v365, 2
        %v491 = vrot.slane %v365, 4
        %v492 = vrot.slane %v365, 6
        %v493 = vrot.slane %v367, 2
        %v494 = vrot.slane %v367, 4
        %v495 = vrot.slane %v367, 6
        %v496 = vrot.slane %v368, 2
        %v497 = vrot.slane %v368, 4
        %v498 = vrot.slane %v368, 6
        %v499 = vrot.slane %v370, 2
        %v500 = vrot.slane %v370, 4
        %v501 = vrot.slane %v370, 6
        %v502 = vrot.slane %v371, 2
        %v503 = vrot.slane %v371, 4
        %v504 = vrot.slane %v371, 6
        %v505 = vrot.slane %v373, 2
        %v506 = vrot.slane %v373, 4
        %v507 = vrot.slane %v373, 6
        %v508 = vrot.slane %v374, 2
        %v509 = vrot.slane %v374, 4
        %v510 = vrot.slane %v374, 6
        %v511 = vrot.slane %v376, 2
        %v512 = vrot.slane %v376, 4
        %v513 = vrot.slane %v376, 6
        %v514 = vrot.slane %v377, 2
        %v515 = vrot.slane %v377, 4
        %v516 = vrot.slane %v377, 6
        %v517 = vrot.slane %v379, 2
        %v518 = vrot.slane %v379, 4
        %v519 = vrot.slane %v379, 6
        %v520 = vrot.slane %v380, 2
        %v521 = vrot.slane %v380, 4
        %v522 = vrot.slane %v380, 6
        %v523 = vrot.slane %v382, 2
        %v524 = vrot.slane %v382, 4
        %v525 = vrot.slane %v382, 6
        %v526 = vrot.slane %v383, 2
        %v527 = vrot.slane %v383, 4
        %v528 = vrot.slane %v383, 6
        %v529 = vrot.slane %v385, 2
        %v530 = vrot.slane %v385, 4
        %v531 = vrot.slane %v385, 6
        %v532 = vrot.slane %v386, 2
        %v533 = vrot.slane %v386, 4
        %v534 = vrot.slane %v386, 6
        %v535 = vrot.slane %v388, 2
        %v536 = vrot.slane %v388, 4
        %v537 = vrot.slane %v388, 6
        %v538 = vrot.slane %v389, 2
        %v539 = vrot.slane %v389, 4
        %v540 = vrot.slane %v389, 6
        %v541 = vrot.slane %v391, 2
        %v542 = vrot.slane %v391, 4
        %v543 = vrot.slane %v391, 6
        %v544 = vrot.slane %v392, 2
        %v545 = vrot.slane %v392, 4
        %v546 = vrot.slane %v392, 6
        %v547 = vrot.slane %v394, 2
        %v548 = vrot.slane %v394, 4
        %v549 = vrot.slane %v394, 6
        %v550 = vrot.slane %v395, 2
        %v551 = vrot.slane %v395, 4
        %v552 = vrot.slane %v395, 6
        %v553 = vrot.slane %v397, 2
        %v554 = vrot.slane %v397, 4
        %v555 = vrot.slane %v397, 6
        %v556 = vrot.slane %v398, 2
        %v557 = vrot.slane %v398, 4
        %v558 = vrot.slane %v398, 6
        %v559 = vrot.slane %v400, 2
        %v560 = vrot.slane %v400, 4
        %v561 = vrot.slane %v400, 6
        %v562 = vrot.slane %v401, 2
        %v563 = vrot.slane %v401, 4
        %v564 = vrot.slane %v401, 6
        %v565 = vld [vmem:[%s1] sm:$0xf]
        %v566 = vld [vmem:[%s2] sm:$0x1]
        %v568 = vperm.slane %v566, 0
        %570 = vst [vmem:[#allocation1] ss:$4 sm:$0xff] %v349
        %s571 = scalar_lea.vmem [#allocation1], 1
        %572 = vst [vmem:[%s571] ss:$4 sm:$0xff] %v457
        %s573 = scalar_lea.vmem [#allocation1], 2
        %574 = vst [vmem:[%s573] ss:$4 sm:$0xff] %v458
        %s575 = scalar_lea.vmem [#allocation1], 3
        %576 = vst [vmem:[%s575] ss:$4 sm:$0xff] %v459
        %s577 = scalar_lea.vmem [#allocation1], 32
        %578 = vst [vmem:[%s577] ss:$4 sm:$0xff] %v350
        %s579 = scalar_lea.vmem [#allocation1], 33
        %580 = vst [vmem:[%s579] ss:$4 sm:$0xff] %v460
        %s581 = scalar_lea.vmem [#allocation1], 34
        %582 = vst [vmem:[%s581] ss:$4 sm:$0xff] %v461
        %s583 = scalar_lea.vmem [#allocation1], 35
        %584 = vst [vmem:[%s583] ss:$4 sm:$0xff] %v462
        %v585 = vld.sshfl [vmem:[#allocation1] sm:$0xff pattern:$0x73625140]
        %v586 = vld.sshfl [vmem:[#allocation1 + $0x20] sm:$0xff pattern:$0x73625140]
        %587 = vst [vmem:[#allocation1] ss:$4 sm:$0xff] %v351
        %588 = vst [vmem:[%s571] ss:$4 sm:$0xff] %v352
        %589 = vst [vmem:[%s573] ss:$4 sm:$0xff] %v463
        %590 = vst [vmem:[%s575] ss:$4 sm:$0xff] %v464
        %591 = vst [vmem:[%s577] ss:$4 sm:$0xff] %v465
        %592 = vst [vmem:[%s579] ss:$4 sm:$0xff] %v353
        %593 = vst [vmem:[%s581] ss:$4 sm:$0xff] %v466
        %594 = vst [vmem:[%s583] ss:$4 sm:$0xff] %v467
        %v595 = vld.sshfl [vmem:[#allocation1] sm:$0xff pattern:$0x73625140]
        %v596 = vld.sshfl [vmem:[#allocation1 + $0x20] sm:$0xff pattern:$0x73625140]
        %597 = vst [vmem:[#allocation1] ss:$4 sm:$0xff] %v468
        %598 = vst [vmem:[%s571] ss:$4 sm:$0xff] %v354
        %599 = vst [vmem:[%s573] ss:$4 sm:$0xff] %v355
        %600 = vst [vmem:[%s575] ss:$4 sm:$0xff] %v469
        %601 = vst [vmem:[%s577] ss:$4 sm:$0xff] %v470
        %602 = vst [vmem:[%s579] ss:$4 sm:$0xff] %v471
        %603 = vst [vmem:[%s581] ss:$4 sm:$0xff] %v356
        %604 = vst [vmem:[%s583] ss:$4 sm:$0xff] %v472
        %v605 = vld.sshfl [vmem:[#allocation1] sm:$0xff pattern:$0x73625140]
        %v606 = vld.sshfl [vmem:[#allocation1 + $0x20] sm:$0xff pattern:$0x73625140]
        %607 = vst [vmem:[#allocation1] ss:$4 sm:$0xff] %v473
        %608 = vst [vmem:[%s571] ss:$4 sm:$0xff] %v474
        %609 = vst [vmem:[%s573] ss:$4 sm:$0xff] %v357
        %610 = vst [vmem:[%s575] ss:$4 sm:$0xff] %v358
        %611 = vst [vmem:[%s577] ss:$4 sm:$0xff] %v475
        %612 = vst [vmem:[%s579] ss:$4 sm:$0xff] %v476
        %613 = vst [vmem:[%s581] ss:$4 sm:$0xff] %v477
        %614 = vst [vmem:[%s583] ss:$4 sm:$0xff] %v359
        %v615 = vld.sshfl [vmem:[#allocation1] sm:$0xff pattern:$0x73625140]
        %v616 = vld.sshfl [vmem:[#allocation1 + $0x20] sm:$0xff pattern:$0x73625140]
        %617 = vst [vmem:[#allocation1] ss:$4 sm:$0xff] %v478
        %618 = vst [vmem:[%s571] ss:$4 sm:$0xff] %v479
        %619 = vst [vmem:[%s573] ss:$4 sm:$0xff] %v480
        %620 = vst [vmem:[%s575] ss:$4 sm:$0xff] %v360
        %621 = vst [vmem:[%s577] ss:$4 sm:$0xff] %v361
        %622 = vst [vmem:[%s579] ss:$4 sm:$0xff] %v481
        %623 = vst [vmem:[%s581] ss:$4 sm:$0xff] %v482
        %624 = vst [vmem:[%s583] ss:$4 sm:$0xff] %v483
        %v625 = vld.sshfl [vmem:[#allocation1] sm:$0xff pattern:$0x73625140]
        %v626 = vld.sshfl [vmem:[#allocation1 + $0x20] sm:$0xff pattern:$0x73625140]
        %627 = vst [vmem:[#allocation1] ss:$4 sm:$0xff] %v362
        %628 = vst [vmem:[%s571] ss:$4 sm:$0xff] %v484
        %629 = vst [vmem:[%s573] ss:$4 sm:$0xff] %v485
        %630 = vst [vmem:[%s575] ss:$4 sm:$0xff] %v486
        %631 = vst [vmem:[%s577] ss:$4 sm:$0xff] %v363
        %632 = vst [vmem:[%s579] ss:$4 sm:$0xff] %v364
        %633 = vst [vmem:[%s581] ss:$4 sm:$0xff] %v487
        %634 = vst [vmem:[%s583] ss:$4 sm:$0xff] %v488
        %v635 = vld.sshfl [vmem:[#allocation1] sm:$0xff pattern:$0x73625140]
        %v636 = vld.sshfl [vmem:[#allocation1 + $0x20] sm:$0xff pattern:$0x73625140]
        %637 = vst [vmem:[#allocation1] ss:$4 sm:$0xff] %v489
        %638 = vst [vmem:[%s571] ss:$4 sm:$0xff] %v365
        %639 = vst [vmem:[%s573] ss:$4 sm:$0xff] %v490
        %640 = vst [vmem:[%s575] ss:$4 sm:$0xff] %v491
        %641 = vst [vmem:[%s577] ss:$4 sm:$0xff] %v492
        %642 = vst [vmem:[%s579] ss:$4 sm:$0xff] %v366
        %643 = vst [vmem:[%s581] ss:$4 sm:$0xff] %v367
        %644 = vst [vmem:[%s583] ss:$4 sm:$0xff] %v493
        %v645 = vld.sshfl [vmem:[#allocation1] sm:$0xff pattern:$0x73625140]
        %v646 = vld.sshfl [vmem:[#allocation1 + $0x20] sm:$0xff pattern:$0x73625140]
        %647 = vst [vmem:[#allocation1] ss:$4 sm:$0xff] %v494
        %648 = vst [vmem:[%s571] ss:$4 sm:$0xff] %v495
        %649 = vst [vmem:[%s573] ss:$4 sm:$0xff] %v368
        %650 = vst [vmem:[%s575] ss:$4 sm:$0xff] %v496
        %651 = vst [vmem:[%s577] ss:$4 sm:$0xff] %v497
        %652 = vst [vmem:[%s579] ss:$4 sm:$0xff] %v498
        %653 = vst [vmem:[%s581] ss:$4 sm:$0xff] %v369
        %654 = vst [vmem:[%s583] ss:$4 sm:$0xff] %v370
        %v655 = vld.sshfl [vmem:[#allocation1] sm:$0xff pattern:$0x73625140]
        %v656 = vld.sshfl [vmem:[#allocation1 + $0x20] sm:$0xff pattern:$0x73625140]
        %657 = vst [vmem:[#allocation1] ss:$4 sm:$0xff] %v499
        %658 = vst [vmem:[%s571] ss:$4 sm:$0xff] %v500
        %659 = vst [vmem:[%s573] ss:$4 sm:$0xff] %v501
        %660 = vst [vmem:[%s575] ss:$4 sm:$0xff] %v371
        %661 = vst [vmem:[%s577] ss:$4 sm:$0xff] %v502
        %662 = vst [vmem:[%s579] ss:$4 sm:$0xff] %v503
        %663 = vst [vmem:[%s581] ss:$4 sm:$0xff] %v504
        %664 = vst [vmem:[%s583] ss:$4 sm:$0xff] %v372
        %v665 = vld.sshfl [vmem:[#allocation1] sm:$0xff pattern:$0x73625140]
        %v666 = vld.sshfl [vmem:[#allocation1 + $0x20] sm:$0xff pattern:$0x73625140]
        %667 = vst [vmem:[#allocation1] ss:$4 sm:$0xff] %v373
        %668 = vst [vmem:[%s571] ss:$4 sm:$0xff] %v505
        %669 = vst [vmem:[%s573] ss:$4 sm:$0xff] %v506
        %670 = vst [vmem:[%s575] ss:$4 sm:$0xff] %v507
        %671 = vst [vmem:[%s577] ss:$4 sm:$0xff] %v374
        %672 = vst [vmem:[%s579] ss:$4 sm:$0xff] %v508
        %673 = vst [vmem:[%s581] ss:$4 sm:$0xff] %v509
        %674 = vst [vmem:[%s583] ss:$4 sm:$0xff] %v510
        %v675 = vld.sshfl [vmem:[#allocation1] sm:$0xff pattern:$0x73625140]
        %v676 = vld.sshfl [vmem:[#allocation1 + $0x20] sm:$0xff pattern:$0x73625140]
        %677 = vst [vmem:[#allocation1] ss:$4 sm:$0xff] %v375
        %678 = vst [vmem:[%s571] ss:$4 sm:$0xff] %v376
        %679 = vst [vmem:[%s573] ss:$4 sm:$0xff] %v511
        %680 = vst [vmem:[%s575] ss:$4 sm:$0xff] %v512
        %681 = vst [vmem:[%s577] ss:$4 sm:$0xff] %v513
        %682 = vst [vmem:[%s579] ss:$4 sm:$0xff] %v377
        %683 = vst [vmem:[%s581] ss:$4 sm:$0xff] %v514
        %684 = vst [vmem:[%s583] ss:$4 sm:$0xff] %v515
        %v685 = vld.sshfl [vmem:[#allocation1] sm:$0xff pattern:$0x73625140]
        %v686 = vld.sshfl [vmem:[#allocation1 + $0x20] sm:$0xff pattern:$0x73625140]
        %687 = vst [vmem:[#allocation1] ss:$4 sm:$0xff] %v516
        %688 = vst [vmem:[%s571] ss:$4 sm:$0xff] %v378
        %689 = vst [vmem:[%s573] ss:$4 sm:$0xff] %v379
        %690 = vst [vmem:[%s575] ss:$4 sm:$0xff] %v517
        %691 = vst [vmem:[%s577] ss:$4 sm:$0xff] %v518
        %692 = vst [vmem:[%s579] ss:$4 sm:$0xff] %v519
        %693 = vst [vmem:[%s581] ss:$4 sm:$0xff] %v380
        %694 = vst [vmem:[%s583] ss:$4 sm:$0xff] %v520
        %v695 = vld.sshfl [vmem:[#allocation1] sm:$0xff pattern:$0x73625140]
        %v696 = vld.sshfl [vmem:[#allocation1 + $0x20] sm:$0xff pattern:$0x73625140]
        %697 = vst [vmem:[#allocation1] ss:$4 sm:$0xff] %v521
        %698 = vst [vmem:[%s571] ss:$4 sm:$0xff] %v522
        %699 = vst [vmem:[%s573] ss:$4 sm:$0xff] %v381
        %700 = vst [vmem:[%s575] ss:$4 sm:$0xff] %v382
        %701 = vst [vmem:[%s577] ss:$4 sm:$0xff] %v523
        %702 = vst [vmem:[%s579] ss:$4 sm:$0xff] %v524
        %703 = vst [vmem:[%s581] ss:$4 sm:$0xff] %v525
        %704 = vst [vmem:[%s583] ss:$4 sm:$0xff] %v383
        %v705 = vld.sshfl [vmem:[#allocation1] sm:$0xff pattern:$0x73625140]
        %v706 = vld.sshfl [vmem:[#allocation1 + $0x20] sm:$0xff pattern:$0x73625140]
        %707 = vst [vmem:[#allocation1] ss:$4 sm:$0xff] %v526
        %708 = vst [vmem:[%s571] ss:$4 sm:$0xff] %v527
        %709 = vst [vmem:[%s573] ss:$4 sm:$0xff] %v528
        %710 = vst [vmem:[%s575] ss:$4 sm:$0xff] %v384
        %711 = vst [vmem:[%s577] ss:$4 sm:$0xff] %v385
        %712 = vst [vmem:[%s579] ss:$4 sm:$0xff] %v529
        %713 = vst [vmem:[%s581] ss:$4 sm:$0xff] %v530
        %714 = vst [vmem:[%s583] ss:$4 sm:$0xff] %v531
        %v715 = vld.sshfl [vmem:[#allocation1] sm:$0xff pattern:$0x73625140]
        %v716 = vld.sshfl [vmem:[#allocation1 + $0x20] sm:$0xff pattern:$0x73625140]
        %717 = vst [vmem:[#allocation1] ss:$4 sm:$0xff] %v386
        %718 = vst [vmem:[%s571] ss:$4 sm:$0xff] %v532
        %719 = vst [vmem:[%s573] ss:$4 sm:$0xff] %v533
        %720 = vst [vmem:[%s575] ss:$4 sm:$0xff] %v534
        %721 = vst [vmem:[%s577] ss:$4 sm:$0xff] %v387
        %722 = vst [vmem:[%s579] ss:$4 sm:$0xff] %v388
        %723 = vst [vmem:[%s581] ss:$4 sm:$0xff] %v535
        %724 = vst [vmem:[%s583] ss:$4 sm:$0xff] %v536
        %v725 = vld.sshfl [vmem:[#allocation1] sm:$0xff pattern:$0x73625140]
        %v726 = vld.sshfl [vmem:[#allocation1 + $0x20] sm:$0xff pattern:$0x73625140]
        %727 = vst [vmem:[#allocation1] ss:$4 sm:$0xff] %v537
        %728 = vst [vmem:[%s571] ss:$4 sm:$0xff] %v389
        %729 = vst [vmem:[%s573] ss:$4 sm:$0xff] %v538
        %730 = vst [vmem:[%s575] ss:$4 sm:$0xff] %v539
        %731 = vst [vmem:[%s577] ss:$4 sm:$0xff] %v540
        %732 = vst [vmem:[%s579] ss:$4 sm:$0xff] %v390
        %733 = vst [vmem:[%s581] ss:$4 sm:$0xff] %v391
        %734 = vst [vmem:[%s583] ss:$4 sm:$0xff] %v541
        %v735 = vld.sshfl [vmem:[#allocation1] sm:$0xff pattern:$0x73625140]
        %v736 = vld.sshfl [vmem:[#allocation1 + $0x20] sm:$0xff pattern:$0x73625140]
        %737 = vst [vmem:[#allocation1] ss:$4 sm:$0xff] %v542
        %738 = vst [vmem:[%s571] ss:$4 sm:$0xff] %v543
        %739 = vst [vmem:[%s573] ss:$4 sm:$0xff] %v392
        %740 = vst [vmem:[%s575] ss:$4 sm:$0xff] %v544
        %741 = vst [vmem:[%s577] ss:$4 sm:$0xff] %v545
        %742 = vst [vmem:[%s579] ss:$4 sm:$0xff] %v546
        %743 = vst [vmem:[%s581] ss:$4 sm:$0xff] %v393
        %744 = vst [vmem:[%s583] ss:$4 sm:$0xff] %v394
        %v745 = vld.sshfl [vmem:[#allocation1] sm:$0xff pattern:$0x73625140]
        %v746 = vld.sshfl [vmem:[#allocation1 + $0x20] sm:$0xff pattern:$0x73625140]
        %747 = vst [vmem:[#allocation1] ss:$4 sm:$0xff] %v547
        %748 = vst [vmem:[%s571] ss:$4 sm:$0xff] %v548
        %749 = vst [vmem:[%s573] ss:$4 sm:$0xff] %v549
        %750 = vst [vmem:[%s575] ss:$4 sm:$0xff] %v395
        %751 = vst [vmem:[%s577] ss:$4 sm:$0xff] %v550
        %752 = vst [vmem:[%s579] ss:$4 sm:$0xff] %v551
        %753 = vst [vmem:[%s581] ss:$4 sm:$0xff] %v552
        %754 = vst [vmem:[%s583] ss:$4 sm:$0xff] %v396
        %v755 = vld.sshfl [vmem:[#allocation1] sm:$0xff pattern:$0x73625140]
        %v756 = vld.sshfl [vmem:[#allocation1 + $0x20] sm:$0xff pattern:$0x73625140]
        %757 = vst [vmem:[#allocation1] ss:$4 sm:$0xff] %v397
        %758 = vst [vmem:[%s571] ss:$4 sm:$0xff] %v553
        %759 = vst [vmem:[%s573] ss:$4 sm:$0xff] %v554
        %760 = vst [vmem:[%s575] ss:$4 sm:$0xff] %v555
        %761 = vst [vmem:[%s577] ss:$4 sm:$0xff] %v398
        %762 = vst [vmem:[%s579] ss:$4 sm:$0xff] %v556
        %763 = vst [vmem:[%s581] ss:$4 sm:$0xff] %v557
        %764 = vst [vmem:[%s583] ss:$4 sm:$0xff] %v558
        %v765 = vld.sshfl [vmem:[#allocation1] sm:$0xff pattern:$0x73625140]
        %v766 = vld.sshfl [vmem:[#allocation1 + $0x20] sm:$0xff pattern:$0x73625140]
        %767 = vst [vmem:[#allocation1] ss:$4 sm:$0xff] %v399
        %768 = vst [vmem:[%s571] ss:$4 sm:$0xff] %v400
        %769 = vst [vmem:[%s573] ss:$4 sm:$0xff] %v559
        %770 = vst [vmem:[%s575] ss:$4 sm:$0xff] %v560
        %771 = vst [vmem:[%s577] ss:$4 sm:$0xff] %v561
        %772 = vst [vmem:[%s579] ss:$4 sm:$0xff] %v401
        %773 = vst [vmem:[%s581] ss:$4 sm:$0xff] %v562
        %774 = vst [vmem:[%s583] ss:$4 sm:$0xff] %v563
        %v775 = vld.sshfl [vmem:[#allocation1] sm:$0xff pattern:$0x73625140]
        %v776 = vld.sshfl [vmem:[#allocation1 + $0x20] sm:$0xff pattern:$0x73625140]
        %777 = vst [vmem:[#allocation1] ss:$4 sm:$0xff] %v564
        %778 = vst [vmem:[%s571] ss:$4 sm:$0xff] %v402
        %v779 = vld.sshfl [vmem:[#allocation1] sm:$0xff pattern:$0x73625140]
        %vm780 = vcmask 31744
        %v781 = vsel %vm780, %v585, 0
        %v783 = vsel %vm780, %v586, 0
        %v785 = vsel %vm780, %v595, 0
        %v787 = vsel %vm780, %v596, 0
        %v789 = vsel %vm780, %v605, 0
        %v791 = vsel %vm780, %v606, 0
        %v793 = vsel %vm780, %v615, 0
        %v795 = vsel %vm780, %v616, 0
        %v797 = vsel %vm780, %v625, 0
        %v799 = vsel %vm780, %v626, 0
        %v801 = vsel %vm780, %v635, 0
        %v803 = vsel %vm780, %v636, 0
        %v805 = vsel %vm780, %v645, 0
        %v807 = vsel %vm780, %v646, 0
        %v809 = vsel %vm780, %v655, 0
        %v811 = vsel %vm780, %v656, 0
        %v813 = vsel %vm780, %v665, 0
        %v815 = vsel %vm780, %v666, 0
        %v817 = vsel %vm780, %v675, 0
        %v819 = vsel %vm780, %v676, 0
        %v821 = vsel %vm780, %v685, 0
        %v823 = vsel %vm780, %v686, 0
        %v825 = vsel %vm780, %v695, 0
        %v827 = vsel %vm780, %v696, 0
        %v829 = vsel %vm780, %v705, 0
        %v831 = vsel %vm780, %v706, 0
        %v833 = vsel %vm780, %v715, 0
        %v835 = vsel %vm780, %v716, 0
        %v837 = vsel %vm780, %v725, 0
        %v839 = vsel %vm780, %v726, 0
        %v841 = vsel %vm780, %v735, 0
        %v843 = vsel %vm780, %v736, 0
        %v845 = vsel %vm780, %v745, 0
        %v847 = vsel %vm780, %v746, 0
        %v849 = vsel %vm780, %v755, 0
        %v851 = vsel %vm780, %v756, 0
        %v853 = vsel %vm780, %v765, 0
        %v855 = vsel %vm780, %v766, 0
        %v857 = vsel %vm780, %v775, 0
        %v859 = vsel %vm780, %v776, 0
        %v861 = vsel %vm780, %v779, 0
        %vm863 = vcmask 1043456
        %v865 = vsel %vm863, %v565, 0
        %867 = vmatpush.msra.mxu0 0.0
        %868 = vmatpush.msra.mxu0 0.0
        %869 = vmatpush.msra.mxu0 0.0
        %870 = vmatpush.msra.mxu0 0.0
        %871 = vmatpush.msra.mxu0 0.0
        %872 = vmatpush.msra.mxu0 0.0
        %873 = vmatpush.msra.mxu0 0.0
        %874 = vmatpush.msra.mxu0 0.0
        %875 = vmatpush.msra.mxu0 0.0
        %876 = vmatpush.msra.mxu0 0.0
        %877 = vmatpush.msra.mxu0 0.0
        %878 = vmatpush.msra.mxu0 0.0
        %879 = vmatpush.msra.mxu0 0.0
        %880 = vmatpush.msra.mxu0 0.0
        %881 = vmatpush.msra.mxu0 0.0
        %882 = vmatpush.msra.mxu0 %v865
        %883 = vmatmul.f32.gmra.mxu0 %v781
        %v884 = vpop.f32.mrf.mxu0
        %v885 = vadd.f32 %v568, %v884
        %886 = vmatmul.f32.gmra.mxu0 %v783
        %v887 = vpop.f32.mrf.mxu0
        %v888 = vadd.f32 %v568, %v887
        %889 = vmatmul.f32.gmra.mxu0 %v785
        %v890 = vpop.f32.mrf.mxu0
        %v891 = vadd.f32 %v568, %v890
        %892 = vmatmul.f32.gmra.mxu0 %v787
        %v893 = vpop.f32.mrf.mxu0
        %v894 = vadd.f32 %v568, %v893
        %895 = vmatmul.f32.gmra.mxu0 %v789
        %v896 = vpop.f32.mrf.mxu0
        %v897 = vadd.f32 %v568, %v896
        %898 = vmatmul.f32.gmra.mxu0 %v791
        %v899 = vpop.f32.mrf.mxu0
        %v900 = vadd.f32 %v568, %v899
        %901 = vmatmul.f32.gmra.mxu0 %v793
        %v902 = vpop.f32.mrf.mxu0
        %v903 = vadd.f32 %v568, %v902
        %904 = vmatmul.f32.gmra.mxu0 %v795
        %v905 = vpop.f32.mrf.mxu0
        %v906 = vadd.f32 %v568, %v905
        %907 = vmatmul.f32.gmra.mxu0 %v797
        %v908 = vpop.f32.mrf.mxu0
        %v909 = vadd.f32 %v568, %v908
        %910 = vmatmul.f32.gmra.mxu0 %v799
        %v911 = vpop.f32.mrf.mxu0
        %v912 = vadd.f32 %v568, %v911
        %913 = vmatmul.f32.gmra.mxu0 %v801
        %v914 = vpop.f32.mrf.mxu0
        %v915 = vadd.f32 %v568, %v914
        %916 = vmatmul.f32.gmra.mxu0 %v803
        %v917 = vpop.f32.mrf.mxu0
        %v918 = vadd.f32 %v568, %v917
        %919 = vmatmul.f32.gmra.mxu0 %v805
        %v920 = vpop.f32.mrf.mxu0
        %v921 = vadd.f32 %v568, %v920
        %922 = vmatmul.f32.gmra.mxu0 %v807
        %v923 = vpop.f32.mrf.mxu0
        %v924 = vadd.f32 %v568, %v923
        %925 = vmatmul.f32.gmra.mxu0 %v809
        %v926 = vpop.f32.mrf.mxu0
        %v927 = vadd.f32 %v568, %v926
        %928 = vmatmul.f32.gmra.mxu0 %v811
        %v929 = vpop.f32.mrf.mxu0
        %v930 = vadd.f32 %v568, %v929
        %931 = vmatmul.f32.gmra.mxu0 %v813
        %v932 = vpop.f32.mrf.mxu0
        %v933 = vadd.f32 %v568, %v932
        %934 = vmatmul.f32.gmra.mxu0 %v815
        %v935 = vpop.f32.mrf.mxu0
        %v936 = vadd.f32 %v568, %v935
        %937 = vmatmul.f32.gmra.mxu0 %v817
        %v938 = vpop.f32.mrf.mxu0
        %v939 = vadd.f32 %v568, %v938
        %940 = vmatmul.f32.gmra.mxu0 %v819
        %v941 = vpop.f32.mrf.mxu0
        %v942 = vadd.f32 %v568, %v941
        %943 = vmatmul.f32.gmra.mxu0 %v821
        %v944 = vpop.f32.mrf.mxu0
        %v945 = vadd.f32 %v568, %v944
        %946 = vmatmul.f32.gmra.mxu0 %v823
        %v947 = vpop.f32.mrf.mxu0
        %v948 = vadd.f32 %v568, %v947
        %949 = vmatmul.f32.gmra.mxu0 %v825
        %v950 = vpop.f32.mrf.mxu0
        %v951 = vadd.f32 %v568, %v950
        %952 = vmatmul.f32.gmra.mxu0 %v827
        %v953 = vpop.f32.mrf.mxu0
        %v954 = vadd.f32 %v568, %v953
        %955 = vmatmul.f32.gmra.mxu0 %v829
        %v956 = vpop.f32.mrf.mxu0
        %v957 = vadd.f32 %v568, %v956
        %958 = vmatmul.f32.gmra.mxu0 %v831
        %v959 = vpop.f32.mrf.mxu0
        %v960 = vadd.f32 %v568, %v959
        %961 = vmatmul.f32.gmra.mxu0 %v833
        %v962 = vpop.f32.mrf.mxu0
        %v963 = vadd.f32 %v568, %v962
        %964 = vmatmul.f32.gmra.mxu0 %v835
        %v965 = vpop.f32.mrf.mxu0
        %v966 = vadd.f32 %v568, %v965
        %967 = vmatmul.f32.gmra.mxu0 %v837
        %v968 = vpop.f32.mrf.mxu0
        %v969 = vadd.f32 %v568, %v968
        %970 = vmatmul.f32.gmra.mxu0 %v839
        %v971 = vpop.f32.mrf.mxu0
        %v972 = vadd.f32 %v568, %v971
        %973 = vmatmul.f32.gmra.mxu0 %v841
        %v974 = vpop.f32.mrf.mxu0
        %v975 = vadd.f32 %v568, %v974
        %976 = vmatmul.f32.gmra.mxu0 %v843
        %v977 = vpop.f32.mrf.mxu0
        %v978 = vadd.f32 %v568, %v977
        %979 = vmatmul.f32.gmra.mxu0 %v845
        %v980 = vpop.f32.mrf.mxu0
        %v981 = vadd.f32 %v568, %v980
        %982 = vmatmul.f32.gmra.mxu0 %v847
        %v983 = vpop.f32.mrf.mxu0
        %v984 = vadd.f32 %v568, %v983
        %985 = vmatmul.f32.gmra.mxu0 %v849
        %v986 = vpop.f32.mrf.mxu0
        %v987 = vadd.f32 %v568, %v986
        %988 = vmatmul.f32.gmra.mxu0 %v851
        %v989 = vpop.f32.mrf.mxu0
        %v990 = vadd.f32 %v568, %v989
        %991 = vmatmul.f32.gmra.mxu0 %v853
        %v992 = vpop.f32.mrf.mxu0
        %v993 = vadd.f32 %v568, %v992
        %994 = vmatmul.f32.gmra.mxu0 %v855
        %v995 = vpop.f32.mrf.mxu0
        %v996 = vadd.f32 %v568, %v995
        %997 = vmatmul.f32.gmra.mxu0 %v857
        %v998 = vpop.f32.mrf.mxu0
        %v999 = vadd.f32 %v568, %v998
        %1000 = vmatmul.f32.gmra.mxu0 %v859
        %v1001 = vpop.f32.mrf.mxu0
        %v1002 = vadd.f32 %v568, %v1001
        %1003 = vmatmul.f32.gmra.mxu0 %v861
        %v1004 = vpop.f32.mrf.mxu0
        %v1005 = vadd.f32 %v568, %v1004
        %1006 = vdwg.mxu0
        %v1007 = vmax.f32 %v885, 0.0
        %v1008 = vmax.f32 %v888, 0.0
        %v1009 = vmax.f32 %v891, 0.0
        %v1010 = vmax.f32 %v894, 0.0
        %v1011 = vmax.f32 %v897, 0.0
        %v1012 = vmax.f32 %v900, 0.0
        %v1013 = vmax.f32 %v903, 0.0
        %v1014 = vmax.f32 %v906, 0.0
        %v1015 = vmax.f32 %v909, 0.0
        %v1016 = vmax.f32 %v912, 0.0
        %v1017 = vmax.f32 %v915, 0.0
        %v1018 = vmax.f32 %v918, 0.0
        %v1019 = vmax.f32 %v921, 0.0
        %v1020 = vmax.f32 %v924, 0.0
        %v1021 = vmax.f32 %v927, 0.0
        %v1022 = vmax.f32 %v930, 0.0
        %v1023 = vmax.f32 %v933, 0.0
        %v1024 = vmax.f32 %v936, 0.0
        %v1025 = vmax.f32 %v939, 0.0
        %v1026 = vmax.f32 %v942, 0.0
        %v1027 = vmax.f32 %v945, 0.0
        %v1028 = vmax.f32 %v948, 0.0
        %v1029 = vmax.f32 %v951, 0.0
        %v1030 = vmax.f32 %v954, 0.0
        %v1031 = vmax.f32 %v957, 0.0
        %v1032 = vmax.f32 %v960, 0.0
        %v1033 = vmax.f32 %v963, 0.0
        %v1034 = vmax.f32 %v966, 0.0
        %v1035 = vmax.f32 %v969, 0.0
        %v1036 = vmax.f32 %v972, 0.0
        %v1037 = vmax.f32 %v975, 0.0
        %v1038 = vmax.f32 %v978, 0.0
        %v1039 = vmax.f32 %v981, 0.0
        %v1040 = vmax.f32 %v984, 0.0
        %v1041 = vmax.f32 %v987, 0.0
        %v1042 = vmax.f32 %v990, 0.0
        %v1043 = vmax.f32 %v993, 0.0
        %v1044 = vmax.f32 %v996, 0.0
        %v1045 = vmax.f32 %v999, 0.0
        %v1046 = vmax.f32 %v1002, 0.0
        %v1047 = vmax.f32 %v1005, 0.0
        %v1089 = vrot.slane %v1007, 2
        %v1090 = vrot.slane %v1007, 4
        %v1091 = vrot.slane %v1007, 6
        %v1092 = vrot.slane %v1008, 2
        %v1093 = vrot.slane %v1008, 4
        %v1094 = vrot.slane %v1008, 6
        %v1095 = vrot.slane %v1009, 2
        %v1096 = vrot.slane %v1009, 4
        %v1097 = vrot.slane %v1009, 6
        %v1098 = vrot.slane %v1010, 2
        %v1099 = vrot.slane %v1010, 4
        %v1100 = vrot.slane %v1010, 6
        %v1101 = vrot.slane %v1011, 2
        %v1102 = vrot.slane %v1011, 4
        %v1103 = vrot.slane %v1011, 6
        %v1104 = vrot.slane %v1012, 2
        %v1105 = vrot.slane %v1012, 4
        %v1106 = vrot.slane %v1012, 6
        %v1107 = vrot.slane %v1013, 2
        %v1108 = vrot.slane %v1013, 4
        %v1109 = vrot.slane %v1013, 6
        %v1110 = vrot.slane %v1014, 2
        %v1111 = vrot.slane %v1014, 4
        %v1112 = vrot.slane %v1014, 6
        %v1113 = vrot.slane %v1015, 2
        %v1114 = vrot.slane %v1015, 4
        %v1115 = vrot.slane %v1015, 6
        %v1116 = vrot.slane %v1016, 2
        %v1117 = vrot.slane %v1016, 4
        %v1118 = vrot.slane %v1016, 6
        %v1119 = vrot.slane %v1017, 2
        %v1120 = vrot.slane %v1017, 4
        %v1121 = vrot.slane %v1017, 6
        %v1122 = vrot.slane %v1018, 2
        %v1123 = vrot.slane %v1018, 4
        %v1124 = vrot.slane %v1018, 6
        %v1125 = vrot.slane %v1019, 2
        %v1126 = vrot.slane %v1019, 4
        %v1127 = vrot.slane %v1019, 6
        %v1128 = vrot.slane %v1020, 2
        %v1129 = vrot.slane %v1020, 4
        %v1130 = vrot.slane %v1020, 6
        %v1131 = vrot.slane %v1021, 2
        %v1132 = vrot.slane %v1021, 4
        %v1133 = vrot.slane %v1021, 6
        %v1134 = vrot.slane %v1022, 2
        %v1135 = vrot.slane %v1022, 4
        %v1136 = vrot.slane %v1022, 6
        %v1137 = vrot.slane %v1023, 2
        %v1138 = vrot.slane %v1023, 4
        %v1139 = vrot.slane %v1023, 6
        %v1140 = vrot.slane %v1024, 2
        %v1141 = vrot.slane %v1024, 4
        %v1142 = vrot.slane %v1024, 6
        %v1143 = vrot.slane %v1025, 2
        %v1144 = vrot.slane %v1025, 4
        %v1145 = vrot.slane %v1025, 6
        %v1146 = vrot.slane %v1026, 2
        %v1147 = vrot.slane %v1026, 4
        %v1148 = vrot.slane %v1026, 6
        %v1149 = vrot.slane %v1027, 2
        %v1150 = vrot.slane %v1027, 4
        %v1151 = vrot.slane %v1027, 6
        %v1152 = vrot.slane %v1028, 2
        %v1153 = vrot.slane %v1028, 4
        %v1154 = vrot.slane %v1028, 6
        %v1155 = vrot.slane %v1029, 2
        %v1156 = vrot.slane %v1029, 4
        %v1157 = vrot.slane %v1029, 6
        %v1158 = vrot.slane %v1030, 2
        %v1159 = vrot.slane %v1030, 4
        %v1160 = vrot.slane %v1030, 6
        %v1161 = vrot.slane %v1031, 2
        %v1162 = vrot.slane %v1031, 4
        %v1163 = vrot.slane %v1031, 6
        %v1164 = vrot.slane %v1032, 2
        %v1165 = vrot.slane %v1032, 4
        %v1166 = vrot.slane %v1032, 6
        %v1167 = vrot.slane %v1033, 2
        %v1168 = vrot.slane %v1033, 4
        %v1169 = vrot.slane %v1033, 6
        %v1170 = vrot.slane %v1034, 2
        %v1171 = vrot.slane %v1034, 4
        %v1172 = vrot.slane %v1034, 6
        %v1173 = vrot.slane %v1035, 2
        %v1174 = vrot.slane %v1035, 4
        %v1175 = vrot.slane %v1035, 6
        %v1176 = vrot.slane %v1036, 2
        %v1177 = vrot.slane %v1036, 4
        %v1178 = vrot.slane %v1036, 6
        %v1179 = vrot.slane %v1037, 2
        %v1180 = vrot.slane %v1037, 4
        %v1181 = vrot.slane %v1037, 6
        %v1182 = vrot.slane %v1038, 2
        %v1183 = vrot.slane %v1038, 4
        %v1184 = vrot.slane %v1038, 6
        %v1185 = vrot.slane %v1039, 2
        %v1186 = vrot.slane %v1039, 4
        %v1187 = vrot.slane %v1039, 6
        %v1188 = vrot.slane %v1040, 2
        %v1189 = vrot.slane %v1040, 4
        %v1190 = vrot.slane %v1040, 6
        %v1191 = vrot.slane %v1041, 2
        %v1192 = vrot.slane %v1041, 4
        %v1193 = vrot.slane %v1041, 6
        %v1194 = vrot.slane %v1042, 2
        %v1195 = vrot.slane %v1042, 4
        %v1196 = vrot.slane %v1042, 6
        %v1197 = vrot.slane %v1043, 2
        %v1198 = vrot.slane %v1043, 4
        %v1199 = vrot.slane %v1043, 6
        %v1200 = vrot.slane %v1044, 2
        %v1201 = vrot.slane %v1044, 4
        %v1202 = vrot.slane %v1044, 6
        %v1203 = vrot.slane %v1045, 2
        %v1204 = vrot.slane %v1045, 4
        %v1205 = vrot.slane %v1045, 6
        %v1206 = vrot.slane %v1046, 2
        %v1207 = vrot.slane %v1046, 4
        %v1208 = vrot.slane %v1046, 6
        %v1209 = vrot.slane %v1047, 2
        %v1210 = vstv %s346
        %v1211 = vadd.s32 %v1210, 1
        %v1212 = vadd.s32 %v1210, 2
        %v1213 = vadd.s32 %v1210, 3
        %v1214 = vadd.s32 %v1210, 4
        %v1215 = vadd.s32 %v1210, 5
        %v1216 = vadd.s32 %v1210, 6
        %v1217 = vadd.s32 %v1210, 7
        %v1218 = vadd.s32 %v1210, 8
        %v1219 = vadd.s32 %v1210, 9
        %v1220 = vadd.s32 %v1210, 10
        %v1221 = vadd.s32 %v1210, 11
        %v1222 = vadd.s32 %v1210, 12
        %v1223 = vadd.s32 %v1210, 13
        %v1224 = vadd.s32 %v1210, 14
        %v1225 = vadd.s32 %v1210, 15
        %v1226 = vadd.s32 %v1210, 16
        %v1227 = vadd.s32 %v1210, 17
        %v1228 = vlaneseq
        %v1229 = vshrl.u32 %v1228, 7
        %v1230 = vadd.s32 %v1229, 8
        %v1231 = vadd.s32 %v1229, 16
        %vm1232 = vcmp.ge.s32.totalorder %v1210, 1
        %vm1233 = vcmp.ge.s32.totalorder %v1211, 1
        %vm1234 = vcmp.ge.s32.totalorder %v1212, 1
        %vm1235 = vcmp.ge.s32.totalorder %v1213, 1
        %vm1236 = vcmp.ge.s32.totalorder %v1214, 1
        %vm1237 = vcmp.ge.s32.totalorder %v1215, 1
        %vm1238 = vcmp.ge.s32.totalorder %v1216, 1
        %vm1239 = vcmp.ge.s32.totalorder %v1217, 1
        %vm1240 = vcmp.ge.s32.totalorder %v1218, 1
        %vm1241 = vcmp.ge.s32.totalorder %v1219, 1
        %vm1242 = vcmp.ge.s32.totalorder %v1220, 1
        %vm1243 = vcmp.ge.s32.totalorder %v1221, 1
        %vm1244 = vcmp.ge.s32.totalorder %v1222, 1
        %vm1245 = vcmp.ge.s32.totalorder %v1223, 1
        %vm1246 = vcmp.ge.s32.totalorder %v1224, 1
        %vm1247 = vcmp.ge.s32.totalorder %v1225, 1
        %vm1248 = vcmp.ge.s32.totalorder %v1226, 1
        %vm1249 = vcmp.ge.s32.totalorder %v1227, 1
        %vm1250 = vcmp.le.s32.totalorder %v1210, 16
        %vm1251 = vcmp.le.s32.totalorder %v1211, 16
        %vm1252 = vcmp.le.s32.totalorder %v1212, 16
        %vm1253 = vcmp.le.s32.totalorder %v1213, 16
        %vm1254 = vcmp.le.s32.totalorder %v1214, 16
        %vm1255 = vcmp.le.s32.totalorder %v1215, 16
        %vm1256 = vcmp.le.s32.totalorder %v1216, 16
        %vm1257 = vcmp.le.s32.totalorder %v1217, 16
        %vm1258 = vcmp.le.s32.totalorder %v1218, 16
        %vm1259 = vcmp.le.s32.totalorder %v1219, 16
        %vm1260 = vcmp.le.s32.totalorder %v1220, 16
        %vm1261 = vcmp.le.s32.totalorder %v1221, 16
        %vm1262 = vcmp.le.s32.totalorder %v1222, 16
        %vm1263 = vcmp.le.s32.totalorder %v1223, 16
        %vm1264 = vcmp.le.s32.totalorder %v1224, 16
        %vm1265 = vcmp.le.s32.totalorder %v1225, 16
        %vm1266 = vcmp.le.s32.totalorder %v1226, 16
        %vm1267 = vcmp.le.s32.totalorder %v1227, 16
        %vm1268 = vmand %vm1232, %vm1250
        %vm1269 = vmand %vm1233, %vm1251
        %vm1270 = vmand %vm1234, %vm1252
        %vm1271 = vmand %vm1235, %vm1253
        %vm1272 = vmand %vm1236, %vm1254
        %vm1273 = vmand %vm1237, %vm1255
        %vm1274 = vmand %vm1238, %vm1256
        %vm1275 = vmand %vm1239, %vm1257
        %vm1276 = vmand %vm1240, %vm1258
        %vm1277 = vmand %vm1241, %vm1259
        %vm1278 = vmand %vm1242, %vm1260
        %vm1279 = vmand %vm1243, %vm1261
        %vm1280 = vmand %vm1244, %vm1262
        %vm1281 = vmand %vm1245, %vm1263
        %vm1282 = vmand %vm1246, %vm1264
        %vm1283 = vmand %vm1247, %vm1265
        %vm1284 = vmand %vm1248, %vm1266
        %vm1285 = vmand %vm1249, %vm1267
        %vm1286 = vcmp.ge.s32.totalorder %v1229, 1
        %vm1287 = vcmp.ge.s32.totalorder %v1230, 1
        %vm1288 = vcmp.ge.s32.totalorder %v1231, 1
        %vm1289 = vmand %vm1268, %vm1286
        %vm1290 = vmand %vm1268, %vm1287
        %vm1291 = vmand %vm1268, %vm1288
        %vm1292 = vmand %vm1269, %vm1286
        %vm1293 = vmand %vm1269, %vm1287
        %vm1294 = vmand %vm1269, %vm1288
        %vm1295 = vmand %vm1270, %vm1286
        %vm1296 = vmand %vm1270, %vm1287
        %vm1297 = vmand %vm1270, %vm1288
        %vm1298 = vmand %vm1271, %vm1286
        %vm1299 = vmand %vm1271, %vm1287
        %vm1300 = vmand %vm1271, %vm1288
        %vm1301 = vmand %vm1272, %vm1286
        %vm1302 = vmand %vm1272, %vm1287
        %vm1303 = vmand %vm1272, %vm1288
        %vm1304 = vmand %vm1273, %vm1286
        %vm1305 = vmand %vm1273, %vm1287
        %vm1306 = vmand %vm1273, %vm1288
        %vm1307 = vmand %vm1274, %vm1286
        %vm1308 = vmand %vm1274, %vm1287
        %vm1309 = vmand %vm1274, %vm1288
        %vm1310 = vmand %vm1275, %vm1286
        %vm1311 = vmand %vm1275, %vm1287
        %vm1312 = vmand %vm1275, %vm1288
        %vm1313 = vmand %vm1276, %vm1286
        %vm1314 = vmand %vm1276, %vm1287
        %vm1315 = vmand %vm1276, %vm1288
        %vm1316 = vmand %vm1277, %vm1286
        %vm1317 = vmand %vm1277, %vm1287
        %vm1318 = vmand %vm1277, %vm1288
        %vm1319 = vmand %vm1278, %vm1286
        %vm1320 = vmand %vm1278, %vm1287
        %vm1321 = vmand %vm1278, %vm1288
        %vm1322 = vmand %vm1279, %vm1286
        %vm1323 = vmand %vm1279, %vm1287
        %vm1324 = vmand %vm1279, %vm1288
        %vm1325 = vmand %vm1280, %vm1286
        %vm1326 = vmand %vm1280, %vm1287
        %vm1327 = vmand %vm1280, %vm1288
        %vm1328 = vmand %vm1281, %vm1286
        %vm1329 = vmand %vm1281, %vm1287
        %vm1330 = vmand %vm1281, %vm1288
        %vm1331 = vmand %vm1282, %vm1286
        %vm1332 = vmand %vm1282, %vm1287
        %vm1333 = vmand %vm1282, %vm1288
        %vm1334 = vmand %vm1283, %vm1286
        %vm1335 = vmand %vm1283, %vm1287
        %vm1336 = vmand %vm1283, %vm1288
        %vm1337 = vmand %vm1284, %vm1286
        %vm1338 = vmand %vm1284, %vm1287
        %vm1339 = vmand %vm1284, %vm1288
        %vm1340 = vmand %vm1285, %vm1286
        %vm1341 = vmand %vm1285, %vm1287
        %vm1342 = vmand %vm1285, %vm1288
        %vm1343 = vcmp.le.s32.totalorder %v1229, 16
        %vm1344 = vcmp.le.s32.totalorder %v1230, 16
        %vm1345 = vcmp.le.s32.totalorder %v1231, 16
        %vm1346 = vmand %vm1289, %vm1343
        %vm1347 = vmand %vm1290, %vm1344
        %vm1348 = vmand %vm1291, %vm1345
        %vm1349 = vmand %vm1292, %vm1343
        %vm1350 = vmand %vm1293, %vm1344
        %vm1351 = vmand %vm1294, %vm1345
        %vm1352 = vmand %vm1295, %vm1343
        %vm1353 = vmand %vm1296, %vm1344
        %vm1354 = vmand %vm1297, %vm1345
        %vm1355 = vmand %vm1298, %vm1343
        %vm1356 = vmand %vm1299, %vm1344
        %vm1357 = vmand %vm1300, %vm1345
        %vm1358 = vmand %vm1301, %vm1343
        %vm1359 = vmand %vm1302, %vm1344
        %vm1360 = vmand %vm1303, %vm1345
        %vm1361 = vmand %vm1304, %vm1343
        %vm1362 = vmand %vm1305, %vm1344
        %vm1363 = vmand %vm1306, %vm1345
        %vm1364 = vmand %vm1307, %vm1343
        %vm1365 = vmand %vm1308, %vm1344
        %vm1366 = vmand %vm1309, %vm1345
        %vm1367 = vmand %vm1310, %vm1343
        %vm1368 = vmand %vm1311, %vm1344
        %vm1369 = vmand %vm1312, %vm1345
        %vm1370 = vmand %vm1313, %vm1343
        %vm1371 = vmand %vm1314, %vm1344
        %vm1372 = vmand %vm1315, %vm1345
        %vm1373 = vmand %vm1316, %vm1343
        %vm1374 = vmand %vm1317, %vm1344
        %vm1375 = vmand %vm1318, %vm1345
        %vm1376 = vmand %vm1319, %vm1343
        %vm1377 = vmand %vm1320, %vm1344
        %vm1378 = vmand %vm1321, %vm1345
        %vm1379 = vmand %vm1322, %vm1343
        %vm1380 = vmand %vm1323, %vm1344
        %vm1381 = vmand %vm1324, %vm1345
        %vm1382 = vmand %vm1325, %vm1343
        %vm1383 = vmand %vm1326, %vm1344
        %vm1384 = vmand %vm1327, %vm1345
        %vm1385 = vmand %vm1328, %vm1343
        %vm1386 = vmand %vm1329, %vm1344
        %vm1387 = vmand %vm1330, %vm1345
        %vm1388 = vmand %vm1331, %vm1343
        %vm1389 = vmand %vm1332, %vm1344
        %vm1390 = vmand %vm1333, %vm1345
        %vm1391 = vmand %vm1334, %vm1343
        %vm1392 = vmand %vm1335, %vm1344
        %vm1393 = vmand %vm1336, %vm1345
        %vm1394 = vmand %vm1337, %vm1343
        %vm1395 = vmand %vm1338, %vm1344
        %vm1396 = vmand %vm1339, %vm1345
        %vm1397 = vmand %vm1340, %vm1343
        %vm1398 = vmand %vm1341, %vm1344
        %vm1399 = vmand %vm1342, %vm1345
        %1400 = vst [vmem:[#allocation1] ss:$4 sm:$0xff] %v1007
        %s1401 = scalar_lea.vmem [#allocation1], 1
        %1402 = vst [vmem:[%s1401] ss:$4 sm:$0xff] %v1089
        %s1403 = scalar_lea.vmem [#allocation1], 2
        %1404 = vst [vmem:[%s1403] ss:$4 sm:$0xff] %v1090
        %s1405 = scalar_lea.vmem [#allocation1], 3
        %1406 = vst [vmem:[%s1405] ss:$4 sm:$0xff] %v1091
        %s1407 = scalar_lea.vmem [#allocation1], 32
        %1408 = vst [vmem:[%s1407] ss:$4 sm:$0xff] %v1008
        %s1409 = scalar_lea.vmem [#allocation1], 33
        %1410 = vst [vmem:[%s1409] ss:$4 sm:$0xff] %v1092
        %s1411 = scalar_lea.vmem [#allocation1], 34
        %1412 = vst [vmem:[%s1411] ss:$4 sm:$0xff] %v1093
        %s1413 = scalar_lea.vmem [#allocation1], 35
        %1414 = vst [vmem:[%s1413] ss:$4 sm:$0xff] %v1094
        %v1415 = vld.sshfl [vmem:[#allocation1] sm:$0xff pattern:$0x73625140]
        %v1416 = vld.sshfl [vmem:[#allocation1 + $0x20] sm:$0xff pattern:$0x73625140]
        %1417 = vst [vmem:[#allocation1] ss:$4 sm:$0xff] %v1009
        %v1418 = vld.sshfl [vmem:[#allocation1] sm:$0xff pattern:$0x73625140]
        %1419 = vst [vmem:[%s1407] ss:$4 sm:$0xff] %v1095
        %1420 = vst [vmem:[%s1409] ss:$4 sm:$0xff] %v1096
        %1421 = vst [vmem:[%s1411] ss:$4 sm:$0xff] %v1097
        %1422 = vst [vmem:[%s1413] ss:$4 sm:$0xff] %v1010
        %v1423 = vld.sshfl [vmem:[#allocation1 + $0x20] sm:$0xff pattern:$0x73625140]
        %1424 = vst [vmem:[#allocation1] ss:$4 sm:$0xff] %v1098
        %1425 = vst [vmem:[%s1401] ss:$4 sm:$0xff] %v1099
        %1426 = vst [vmem:[%s1403] ss:$4 sm:$0xff] %v1100
        %1427 = vst [vmem:[%s1405] ss:$4 sm:$0xff] %v1011
        %1428 = vst [vmem:[%s1407] ss:$4 sm:$0xff] %v1101
        %v1429 = vld.sshfl [vmem:[#allocation1] sm:$0xff pattern:$0x73625140]
        %v1430 = vld.sshfl [vmem:[#allocation1 + $0x20] sm:$0xff pattern:$0x73625140]
        %1431 = vst [vmem:[#allocation1] ss:$4 sm:$0xff] %v1102
        %1432 = vst [vmem:[%s1401] ss:$4 sm:$0xff] %v1103
        %1433 = vst [vmem:[%s1403] ss:$4 sm:$0xff] %v1012
        %1434 = vst [vmem:[%s1405] ss:$4 sm:$0xff] %v1104
        %1435 = vst [vmem:[%s1407] ss:$4 sm:$0xff] %v1105
        %1436 = vst [vmem:[%s1409] ss:$4 sm:$0xff] %v1106
        %1437 = vst [vmem:[%s1411] ss:$4 sm:$0xff] %v1013
        %1438 = vst [vmem:[%s1413] ss:$4 sm:$0xff] %v1107
        %v1439 = vld.sshfl [vmem:[#allocation1] sm:$0xff pattern:$0x73625140]
        %v1440 = vld.sshfl [vmem:[#allocation1 + $0x20] sm:$0xff pattern:$0x73625140]
        %1441 = vst [vmem:[#allocation1] ss:$4 sm:$0xff] %v1108
        %v1442 = vld.sshfl [vmem:[#allocation1] sm:$0xff pattern:$0x73625140]
        %1443 = vst [vmem:[%s1407] ss:$4 sm:$0xff] %v1109
        %1444 = vst [vmem:[%s1409] ss:$4 sm:$0xff] %v1014
        %1445 = vst [vmem:[%s1411] ss:$4 sm:$0xff] %v1110
        %1446 = vst [vmem:[%s1413] ss:$4 sm:$0xff] %v1111
        %v1447 = vld.sshfl [vmem:[#allocation1 + $0x20] sm:$0xff pattern:$0x73625140]
        %1448 = vst [vmem:[#allocation1] ss:$4 sm:$0xff] %v1112
        %1449 = vst [vmem:[%s1401] ss:$4 sm:$0xff] %v1015
        %1450 = vst [vmem:[%s1403] ss:$4 sm:$0xff] %v1113
        %1451 = vst [vmem:[%s1405] ss:$4 sm:$0xff] %v1114
        %1452 = vst [vmem:[%s1407] ss:$4 sm:$0xff] %v1115
        %v1453 = vld.sshfl [vmem:[#allocation1] sm:$0xff pattern:$0x73625140]
        %v1454 = vld.sshfl [vmem:[#allocation1 + $0x20] sm:$0xff pattern:$0x73625140]
        %1455 = vst [vmem:[#allocation1] ss:$4 sm:$0xff] %v1016
        %1456 = vst [vmem:[%s1401] ss:$4 sm:$0xff] %v1116
        %1457 = vst [vmem:[%s1403] ss:$4 sm:$0xff] %v1117
        %1458 = vst [vmem:[%s1405] ss:$4 sm:$0xff] %v1118
        %1459 = vst [vmem:[%s1407] ss:$4 sm:$0xff] %v1017
        %1460 = vst [vmem:[%s1409] ss:$4 sm:$0xff] %v1119
        %1461 = vst [vmem:[%s1411] ss:$4 sm:$0xff] %v1120
        %1462 = vst [vmem:[%s1413] ss:$4 sm:$0xff] %v1121
        %v1463 = vld.sshfl [vmem:[#allocation1] sm:$0xff pattern:$0x73625140]
        %v1464 = vld.sshfl [vmem:[#allocation1 + $0x20] sm:$0xff pattern:$0x73625140]
        %1465 = vst [vmem:[#allocation1] ss:$4 sm:$0xff] %v1018
        %v1466 = vld.sshfl [vmem:[#allocation1] sm:$0xff pattern:$0x73625140]
        %1467 = vst [vmem:[%s1407] ss:$4 sm:$0xff] %v1122
        %1468 = vst [vmem:[%s1409] ss:$4 sm:$0xff] %v1123
        %1469 = vst [vmem:[%s1411] ss:$4 sm:$0xff] %v1124
        %1470 = vst [vmem:[%s1413] ss:$4 sm:$0xff] %v1019
        %v1471 = vld.sshfl [vmem:[#allocation1 + $0x20] sm:$0xff pattern:$0x73625140]
        %1472 = vst [vmem:[#allocation1] ss:$4 sm:$0xff] %v1125
        %1473 = vst [vmem:[%s1401] ss:$4 sm:$0xff] %v1126
        %1474 = vst [vmem:[%s1403] ss:$4 sm:$0xff] %v1127
        %1475 = vst [vmem:[%s1405] ss:$4 sm:$0xff] %v1020
        %1476 = vst [vmem:[%s1407] ss:$4 sm:$0xff] %v1128
        %v1477 = vld.sshfl [vmem:[#allocation1] sm:$0xff pattern:$0x73625140]
        %v1478 = vld.sshfl [vmem:[#allocation1 + $0x20] sm:$0xff pattern:$0x73625140]
        %1479 = vst [vmem:[#allocation1] ss:$4 sm:$0xff] %v1129
        %1480 = vst [vmem:[%s1401] ss:$4 sm:$0xff] %v1130
        %1481 = vst [vmem:[%s1403] ss:$4 sm:$0xff] %v1021
        %1482 = vst [vmem:[%s1405] ss:$4 sm:$0xff] %v1131
        %1483 = vst [vmem:[%s1407] ss:$4 sm:$0xff] %v1132
        %1484 = vst [vmem:[%s1409] ss:$4 sm:$0xff] %v1133
        %1485 = vst [vmem:[%s1411] ss:$4 sm:$0xff] %v1022
        %1486 = vst [vmem:[%s1413] ss:$4 sm:$0xff] %v1134
        %v1487 = vld.sshfl [vmem:[#allocation1] sm:$0xff pattern:$0x73625140]
        %v1488 = vld.sshfl [vmem:[#allocation1 + $0x20] sm:$0xff pattern:$0x73625140]
        %1489 = vst [vmem:[#allocation1] ss:$4 sm:$0xff] %v1135
        %v1490 = vld.sshfl [vmem:[#allocation1] sm:$0xff pattern:$0x73625140]
        %1491 = vst [vmem:[%s1407] ss:$4 sm:$0xff] %v1136
        %1492 = vst [vmem:[%s1409] ss:$4 sm:$0xff] %v1023
        %1493 = vst [vmem:[%s1411] ss:$4 sm:$0xff] %v1137
        %1494 = vst [vmem:[%s1413] ss:$4 sm:$0xff] %v1138
        %v1495 = vld.sshfl [vmem:[#allocation1 + $0x20] sm:$0xff pattern:$0x73625140]
        %1496 = vst [vmem:[#allocation1] ss:$4 sm:$0xff] %v1139
        %1497 = vst [vmem:[%s1401] ss:$4 sm:$0xff] %v1024
        %1498 = vst [vmem:[%s1403] ss:$4 sm:$0xff] %v1140
        %1499 = vst [vmem:[%s1405] ss:$4 sm:$0xff] %v1141
        %1500 = vst [vmem:[%s1407] ss:$4 sm:$0xff] %v1142
        %v1501 = vld.sshfl [vmem:[#allocation1] sm:$0xff pattern:$0x73625140]
        %v1502 = vld.sshfl [vmem:[#allocation1 + $0x20] sm:$0xff pattern:$0x73625140]
        %1503 = vst [vmem:[#allocation1] ss:$4 sm:$0xff] %v1025
        %1504 = vst [vmem:[%s1401] ss:$4 sm:$0xff] %v1143
        %1505 = vst [vmem:[%s1403] ss:$4 sm:$0xff] %v1144
        %1506 = vst [vmem:[%s1405] ss:$4 sm:$0xff] %v1145
        %1507 = vst [vmem:[%s1407] ss:$4 sm:$0xff] %v1026
        %1508 = vst [vmem:[%s1409] ss:$4 sm:$0xff] %v1146
        %1509 = vst [vmem:[%s1411] ss:$4 sm:$0xff] %v1147
        %1510 = vst [vmem:[%s1413] ss:$4 sm:$0xff] %v1148
        %v1511 = vld.sshfl [vmem:[#allocation1] sm:$0xff pattern:$0x73625140]
        %v1512 = vld.sshfl [vmem:[#allocation1 + $0x20] sm:$0xff pattern:$0x73625140]
        %1513 = vst [vmem:[#allocation1] ss:$4 sm:$0xff] %v1027
        %v1514 = vld.sshfl [vmem:[#allocation1] sm:$0xff pattern:$0x73625140]
        %1515 = vst [vmem:[%s1407] ss:$4 sm:$0xff] %v1149
        %1516 = vst [vmem:[%s1409] ss:$4 sm:$0xff] %v1150
        %1517 = vst [vmem:[%s1411] ss:$4 sm:$0xff] %v1151
        %1518 = vst [vmem:[%s1413] ss:$4 sm:$0xff] %v1028
        %v1519 = vld.sshfl [vmem:[#allocation1 + $0x20] sm:$0xff pattern:$0x73625140]
        %1520 = vst [vmem:[#allocation1] ss:$4 sm:$0xff] %v1152
        %1521 = vst [vmem:[%s1401] ss:$4 sm:$0xff] %v1153
        %1522 = vst [vmem:[%s1403] ss:$4 sm:$0xff] %v1154
        %1523 = vst [vmem:[%s1405] ss:$4 sm:$0xff] %v1029
        %1524 = vst [vmem:[%s1407] ss:$4 sm:$0xff] %v1155
        %v1525 = vld.sshfl [vmem:[#allocation1] sm:$0xff pattern:$0x73625140]
        %v1526 = vld.sshfl [vmem:[#allocation1 + $0x20] sm:$0xff pattern:$0x73625140]
        %1527 = vst [vmem:[#allocation1] ss:$4 sm:$0xff] %v1156
        %1528 = vst [vmem:[%s1401] ss:$4 sm:$0xff] %v1157
        %1529 = vst [vmem:[%s1403] ss:$4 sm:$0xff] %v1030
        %1530 = vst [vmem:[%s1405] ss:$4 sm:$0xff] %v1158
        %1531 = vst [vmem:[%s1407] ss:$4 sm:$0xff] %v1159
        %1532 = vst [vmem:[%s1409] ss:$4 sm:$0xff] %v1160
        %1533 = vst [vmem:[%s1411] ss:$4 sm:$0xff] %v1031
        %1534 = vst [vmem:[%s1413] ss:$4 sm:$0xff] %v1161
        %v1535 = vld.sshfl [vmem:[#allocation1] sm:$0xff pattern:$0x73625140]
        %v1536 = vld.sshfl [vmem:[#allocation1 + $0x20] sm:$0xff pattern:$0x73625140]
        %1537 = vst [vmem:[#allocation1] ss:$4 sm:$0xff] %v1162
        %v1538 = vld.sshfl [vmem:[#allocation1] sm:$0xff pattern:$0x73625140]
        %1539 = vst [vmem:[%s1407] ss:$4 sm:$0xff] %v1163
        %1540 = vst [vmem:[%s1409] ss:$4 sm:$0xff] %v1032
        %1541 = vst [vmem:[%s1411] ss:$4 sm:$0xff] %v1164
        %1542 = vst [vmem:[%s1413] ss:$4 sm:$0xff] %v1165
        %v1543 = vld.sshfl [vmem:[#allocation1 + $0x20] sm:$0xff pattern:$0x73625140]
        %1544 = vst [vmem:[#allocation1] ss:$4 sm:$0xff] %v1166
        %1545 = vst [vmem:[%s1401] ss:$4 sm:$0xff] %v1033
        %1546 = vst [vmem:[%s1403] ss:$4 sm:$0xff] %v1167
        %1547 = vst [vmem:[%s1405] ss:$4 sm:$0xff] %v1168
        %1548 = vst [vmem:[%s1407] ss:$4 sm:$0xff] %v1169
        %v1549 = vld.sshfl [vmem:[#allocation1] sm:$0xff pattern:$0x73625140]
        %v1550 = vld.sshfl [vmem:[#allocation1 + $0x20] sm:$0xff pattern:$0x73625140]
        %1551 = vst [vmem:[#allocation1] ss:$4 sm:$0xff] %v1034
        %1552 = vst [vmem:[%s1401] ss:$4 sm:$0xff] %v1170
        %1553 = vst [vmem:[%s1403] ss:$4 sm:$0xff] %v1171
        %1554 = vst [vmem:[%s1405] ss:$4 sm:$0xff] %v1172
        %1555 = vst [vmem:[%s1407] ss:$4 sm:$0xff] %v1035
        %1556 = vst [vmem:[%s1409] ss:$4 sm:$0xff] %v1173
        %1557 = vst [vmem:[%s1411] ss:$4 sm:$0xff] %v1174
        %1558 = vst [vmem:[%s1413] ss:$4 sm:$0xff] %v1175
        %v1559 = vld.sshfl [vmem:[#allocation1] sm:$0xff pattern:$0x73625140]
        %v1560 = vld.sshfl [vmem:[#allocation1 + $0x20] sm:$0xff pattern:$0x73625140]
        %1561 = vst [vmem:[#allocation1] ss:$4 sm:$0xff] %v1036
        %v1562 = vld.sshfl [vmem:[#allocation1] sm:$0xff pattern:$0x73625140]
        %1563 = vst [vmem:[%s1407] ss:$4 sm:$0xff] %v1176
        %1564 = vst [vmem:[%s1409] ss:$4 sm:$0xff] %v1177
        %1565 = vst [vmem:[%s1411] ss:$4 sm:$0xff] %v1178
        %1566 = vst [vmem:[%s1413] ss:$4 sm:$0xff] %v1037
        %v1567 = vld.sshfl [vmem:[#allocation1 + $0x20] sm:$0xff pattern:$0x73625140]
        %1568 = vst [vmem:[#allocation1] ss:$4 sm:$0xff] %v1179
        %1569 = vst [vmem:[%s1401] ss:$4 sm:$0xff] %v1180
        %1570 = vst [vmem:[%s1403] ss:$4 sm:$0xff] %v1181
        %1571 = vst [vmem:[%s1405] ss:$4 sm:$0xff] %v1038
        %1572 = vst [vmem:[%s1407] ss:$4 sm:$0xff] %v1182
        %v1573 = vld.sshfl [vmem:[#allocation1] sm:$0xff pattern:$0x73625140]
        %v1574 = vld.sshfl [vmem:[#allocation1 + $0x20] sm:$0xff pattern:$0x73625140]
        %1575 = vst [vmem:[#allocation1] ss:$4 sm:$0xff] %v1183
        %1576 = vst [vmem:[%s1401] ss:$4 sm:$0xff] %v1184
        %1577 = vst [vmem:[%s1403] ss:$4 sm:$0xff] %v1039
        %1578 = vst [vmem:[%s1405] ss:$4 sm:$0xff] %v1185
        %1579 = vst [vmem:[%s1407] ss:$4 sm:$0xff] %v1186
        %1580 = vst [vmem:[%s1409] ss:$4 sm:$0xff] %v1187
        %1581 = vst [vmem:[%s1411] ss:$4 sm:$0xff] %v1040
        %1582 = vst [vmem:[%s1413] ss:$4 sm:$0xff] %v1188
        %v1583 = vld.sshfl [vmem:[#allocation1] sm:$0xff pattern:$0x73625140]
        %v1584 = vld.sshfl [vmem:[#allocation1 + $0x20] sm:$0xff pattern:$0x73625140]
        %1585 = vst [vmem:[#allocation1] ss:$4 sm:$0xff] %v1189
        %v1586 = vld.sshfl [vmem:[#allocation1] sm:$0xff pattern:$0x73625140]
        %1587 = vst [vmem:[%s1407] ss:$4 sm:$0xff] %v1190
        %1588 = vst [vmem:[%s1409] ss:$4 sm:$0xff] %v1041
        %1589 = vst [vmem:[%s1411] ss:$4 sm:$0xff] %v1191
        %1590 = vst [vmem:[%s1413] ss:$4 sm:$0xff] %v1192
        %v1591 = vld.sshfl [vmem:[#allocation1 + $0x20] sm:$0xff pattern:$0x73625140]
        %1592 = vst [vmem:[#allocation1] ss:$4 sm:$0xff] %v1193
        %1593 = vst [vmem:[%s1401] ss:$4 sm:$0xff] %v1042
        %1594 = vst [vmem:[%s1403] ss:$4 sm:$0xff] %v1194
        %1595 = vst [vmem:[%s1405] ss:$4 sm:$0xff] %v1195
        %1596 = vst [vmem:[%s1407] ss:$4 sm:$0xff] %v1196
        %v1597 = vld.sshfl [vmem:[#allocation1] sm:$0xff pattern:$0x73625140]
        %v1598 = vld.sshfl [vmem:[#allocation1 + $0x20] sm:$0xff pattern:$0x73625140]
        %1599 = vst [vmem:[#allocation1] ss:$4 sm:$0xff] %v1043
        %1600 = vst [vmem:[%s1401] ss:$4 sm:$0xff] %v1197
        %1601 = vst [vmem:[%s1403] ss:$4 sm:$0xff] %v1198
        %1602 = vst [vmem:[%s1405] ss:$4 sm:$0xff] %v1199
        %1603 = vst [vmem:[%s1407] ss:$4 sm:$0xff] %v1044
        %1604 = vst [vmem:[%s1409] ss:$4 sm:$0xff] %v1200
        %1605 = vst [vmem:[%s1411] ss:$4 sm:$0xff] %v1201
        %1606 = vst [vmem:[%s1413] ss:$4 sm:$0xff] %v1202
        %v1607 = vld.sshfl [vmem:[#allocation1] sm:$0xff pattern:$0x73625140]
        %v1608 = vld.sshfl [vmem:[#allocation1 + $0x20] sm:$0xff pattern:$0x73625140]
        %1609 = vst [vmem:[#allocation1] ss:$4 sm:$0xff] %v1045
        %v1610 = vld.sshfl [vmem:[#allocation1] sm:$0xff pattern:$0x73625140]
        %1611 = vst [vmem:[%s1407] ss:$4 sm:$0xff] %v1203
        %1612 = vst [vmem:[%s1409] ss:$4 sm:$0xff] %v1204
        %1613 = vst [vmem:[%s1411] ss:$4 sm:$0xff] %v1205
        %1614 = vst [vmem:[%s1413] ss:$4 sm:$0xff] %v1046
        %v1615 = vld.sshfl [vmem:[#allocation1 + $0x20] sm:$0xff pattern:$0x73625140]
        %1616 = vst [vmem:[#allocation1] ss:$4 sm:$0xff] %v1206
        %1617 = vst [vmem:[%s1401] ss:$4 sm:$0xff] %v1207
        %1618 = vst [vmem:[%s1403] ss:$4 sm:$0xff] %v1208
        %1619 = vst [vmem:[%s1405] ss:$4 sm:$0xff] %v1047
        %1620 = vst [vmem:[%s1407] ss:$4 sm:$0xff] %v1209
        %v1621 = vld.sshfl [vmem:[#allocation1] sm:$0xff pattern:$0x73625140]
        %v1622 = vld.sshfl [vmem:[#allocation1 + $0x20] sm:$0xff pattern:$0x73625140]
        %v1677 = vsel %vm1346, %v1415, 0.0
        %v1678 = vsel %vm1347, %v1416, 0.0
        %v1679 = vsel %vm1348, %v1418, 0.0
        %v1680 = vsel %vm1349, %v1423, 0.0
        %v1681 = vsel %vm1350, %v1429, 0.0
        %v1682 = vsel %vm1351, %v1430, 0.0
        %v1683 = vsel %vm1352, %v1439, 0.0
        %v1684 = vsel %vm1353, %v1440, 0.0
        %v1685 = vsel %vm1354, %v1442, 0.0
        %v1686 = vsel %vm1355, %v1447, 0.0
        %v1687 = vsel %vm1356, %v1453, 0.0
        %v1688 = vsel %vm1357, %v1454, 0.0
        %v1689 = vsel %vm1358, %v1463, 0.0
        %v1690 = vsel %vm1359, %v1464, 0.0
        %v1691 = vsel %vm1360, %v1466, 0.0
        %v1692 = vsel %vm1361, %v1471, 0.0
        %v1693 = vsel %vm1362, %v1477, 0.0
        %v1694 = vsel %vm1363, %v1478, 0.0
        %v1695 = vsel %vm1364, %v1487, 0.0
        %v1696 = vsel %vm1365, %v1488, 0.0
        %v1697 = vsel %vm1366, %v1490, 0.0
        %v1698 = vsel %vm1367, %v1495, 0.0
        %v1699 = vsel %vm1368, %v1501, 0.0
        %v1700 = vsel %vm1369, %v1502, 0.0
        %v1701 = vsel %vm1370, %v1511, 0.0
        %v1702 = vsel %vm1371, %v1512, 0.0
        %v1703 = vsel %vm1372, %v1514, 0.0
        %v1704 = vsel %vm1373, %v1519, 0.0
        %v1705 = vsel %vm1374, %v1525, 0.0
        %v1706 = vsel %vm1375, %v1526, 0.0
        %v1707 = vsel %vm1376, %v1535, 0.0
        %v1708 = vsel %vm1377, %v1536, 0.0
        %v1709 = vsel %vm1378, %v1538, 0.0
        %v1710 = vsel %vm1379, %v1543, 0.0
        %v1711 = vsel %vm1380, %v1549, 0.0
        %v1712 = vsel %vm1381, %v1550, 0.0
        %v1713 = vsel %vm1382, %v1559, 0.0
        %v1714 = vsel %vm1383, %v1560, 0.0
        %v1715 = vsel %vm1384, %v1562, 0.0
        %v1716 = vsel %vm1385, %v1567, 0.0
        %v1717 = vsel %vm1386, %v1573, 0.0
        %v1718 = vsel %vm1387, %v1574, 0.0
        %v1719 = vsel %vm1388, %v1583, 0.0
        %v1720 = vsel %vm1389, %v1584, 0.0
        %v1721 = vsel %vm1390, %v1586, 0.0
        %v1722 = vsel %vm1391, %v1591, 0.0
        %v1723 = vsel %vm1392, %v1597, 0.0
        %v1724 = vsel %vm1393, %v1598, 0.0
        %v1725 = vsel %vm1394, %v1607, 0.0
        %v1726 = vsel %vm1395, %v1608, 0.0
        %v1727 = vsel %vm1396, %v1610, 0.0
        %v1728 = vsel %vm1397, %v1615, 0.0
        %v1729 = vsel %vm1398, %v1621, 0.0
        %v1730 = vsel %vm1399, %v1622, 0.0
        %1731 = vst.msk [vmem:[#allocation2] sm:$0xff] %vm780, %v1677
        %1732 = vst.msk [vmem:[#allocation2 + $0x8] sm:$0xff] %vm780, %v1678
        %vm1733 = vcmask 25600
        %1734 = vst.msk [vmem:[#allocation2 + $0x10] sm:$0x3] %vm1733, %v1679
        %1735 = vst.msk [vmem:[#allocation2 + $0x18] sm:$0xff] %vm780, %v1680
        %1736 = vst.msk [vmem:[#allocation2 + $0x20] sm:$0xff] %vm780, %v1681
        %1737 = vst.msk [vmem:[#allocation2 + $0x28] sm:$0x3] %vm1733, %v1682
        %1738 = vst.msk [vmem:[#allocation2 + $0x30] sm:$0xff] %vm780, %v1683
        %1739 = vst.msk [vmem:[#allocation2 + $0x38] sm:$0xff] %vm780, %v1684
        %1740 = vst.msk [vmem:[#allocation2 + $0x40] sm:$0x3] %vm1733, %v1685
        %1741 = vst.msk [vmem:[#allocation2 + $0x48] sm:$0xff] %vm780, %v1686
        %1742 = vst.msk [vmem:[#allocation2 + $0x50] sm:$0xff] %vm780, %v1687
        %1743 = vst.msk [vmem:[#allocation2 + $0x58] sm:$0x3] %vm1733, %v1688
        %1744 = vst.msk [vmem:[#allocation2 + $0x60] sm:$0xff] %vm780, %v1689
        %1745 = vst.msk [vmem:[#allocation2 + $0x68] sm:$0xff] %vm780, %v1690
        %1746 = vst.msk [vmem:[#allocation2 + $0x70] sm:$0x3] %vm1733, %v1691
        %1747 = vst.msk [vmem:[#allocation2 + $0x78] sm:$0xff] %vm780, %v1692
        %1748 = vst.msk [vmem:[#allocation2 + $0x80] sm:$0xff] %vm780, %v1693
        %1749 = vst.msk [vmem:[#allocation2 + $0x88] sm:$0x3] %vm1733, %v1694
        %1750 = vst.msk [vmem:[#allocation2 + $0x90] sm:$0xff] %vm780, %v1695
        %1751 = vst.msk [vmem:[#allocation2 + $0x98] sm:$0xff] %vm780, %v1696
        %1752 = vst.msk [vmem:[#allocation2 + $0xa0] sm:$0x3] %vm1733, %v1697
        %1753 = vst.msk [vmem:[#allocation2 + $0xa8] sm:$0xff] %vm780, %v1698
        %1754 = vst.msk [vmem:[#allocation2 + $0xb0] sm:$0xff] %vm780, %v1699
        %1755 = vst.msk [vmem:[#allocation2 + $0xb8] sm:$0x3] %vm1733, %v1700
        %1756 = vst.msk [vmem:[#allocation2 + $0xc0] sm:$0xff] %vm780, %v1701
        %1757 = vst.msk [vmem:[#allocation2 + $0xc8] sm:$0xff] %vm780, %v1702
        %1758 = vst.msk [vmem:[#allocation2 + $0xd0] sm:$0x3] %vm1733, %v1703
        %1759 = vst.msk [vmem:[#allocation2 + $0xd8] sm:$0xff] %vm780, %v1704
        %1760 = vst.msk [vmem:[#allocation2 + $0xe0] sm:$0xff] %vm780, %v1705
        %1761 = vst.msk [vmem:[#allocation2 + $0xe8] sm:$0x3] %vm1733, %v1706
        %1762 = vst.msk [vmem:[#allocation2 + $0xf0] sm:$0xff] %vm780, %v1707
        %1763 = vst.msk [vmem:[#allocation2 + $0xf8] sm:$0xff] %vm780, %v1708
        %1764 = vst.msk [vmem:[#allocation2 + $0x100] sm:$0x3] %vm1733, %v1709
        %1765 = vst.msk [vmem:[#allocation2 + $0x108] sm:$0xff] %vm780, %v1710
        %1766 = vst.msk [vmem:[#allocation2 + $0x110] sm:$0xff] %vm780, %v1711
        %1767 = vst.msk [vmem:[#allocation2 + $0x118] sm:$0x3] %vm1733, %v1712
        %1768 = vst.msk [vmem:[#allocation2 + $0x120] sm:$0xff] %vm780, %v1713
        %1769 = vst.msk [vmem:[#allocation2 + $0x128] sm:$0xff] %vm780, %v1714
        %1770 = vst.msk [vmem:[#allocation2 + $0x130] sm:$0x3] %vm1733, %v1715
        %1771 = vst.msk [vmem:[#allocation2 + $0x138] sm:$0xff] %vm780, %v1716
        %1772 = vst.msk [vmem:[#allocation2 + $0x140] sm:$0xff] %vm780, %v1717
        %1773 = vst.msk [vmem:[#allocation2 + $0x148] sm:$0x3] %vm1733, %v1718
        %1774 = vst.msk [vmem:[#allocation2 + $0x150] sm:$0xff] %vm780, %v1719
        %1775 = vst.msk [vmem:[#allocation2 + $0x158] sm:$0xff] %vm780, %v1720
        %1776 = vst.msk [vmem:[#allocation2 + $0x160] sm:$0x3] %vm1733, %v1721
        %1777 = vst.msk [vmem:[#allocation2 + $0x168] sm:$0xff] %vm780, %v1722
        %1778 = vst.msk [vmem:[#allocation2 + $0x170] sm:$0xff] %vm780, %v1723
        %1779 = vst.msk [vmem:[#allocation2 + $0x178] sm:$0x3] %vm1733, %v1724
        %1780 = vst.msk [vmem:[#allocation2 + $0x180] sm:$0xff] %vm780, %v1725
        %1781 = vst.msk [vmem:[#allocation2 + $0x188] sm:$0xff] %vm780, %v1726
        %1782 = vst.msk [vmem:[#allocation2 + $0x190] sm:$0x3] %vm1733, %v1727
        %1783 = vst.msk [vmem:[#allocation2 + $0x198] sm:$0xff] %vm780, %v1728
        %1784 = vst.msk [vmem:[#allocation2 + $0x1a0] sm:$0xff] %vm780, %v1729
        %1785 = vst.msk [vmem:[#allocation2 + $0x1a8] sm:$0x3] %vm1733, %v1730
        %v1786 = vld [vmem:[#allocation2] ss:$2 sm:$0xff]
        %s1787 = scalar_lea.vmem [#allocation2], 48
        %v1788 = vld [vmem:[%s1787] ss:$2 sm:$0xff]
        %s1789 = scalar_lea.vmem [#allocation2], 96
        %v1790 = vld [vmem:[%s1789] ss:$2 sm:$0xff]
        %s1791 = scalar_lea.vmem [#allocation2], 144
        %v1792 = vld [vmem:[%s1791] ss:$2 sm:$0xff]
        %s1793 = scalar_lea.vmem [#allocation2], 192
        %v1794 = vld [vmem:[%s1793] ss:$2 sm:$0xff]
        %s1795 = scalar_lea.vmem [#allocation2], 240
        %v1796 = vld [vmem:[%s1795] ss:$2 sm:$0xff]
        %s1797 = scalar_lea.vmem [#allocation2], 288
        %v1798 = vld [vmem:[%s1797] ss:$2 sm:$0xff]
        %s1799 = scalar_lea.vmem [#allocation2], 336
        %v1800 = vld [vmem:[%s1799] ss:$2 sm:$0xff]
        %s1801 = scalar_lea.vmem [#allocation2], 1
        %v1802 = vld [vmem:[%s1801] ss:$2 sm:$0xff]
        %s1803 = scalar_lea.vmem [#allocation2], 49
        %v1804 = vld [vmem:[%s1803] ss:$2 sm:$0xff]
        %s1805 = scalar_lea.vmem [#allocation2], 97
        %v1806 = vld [vmem:[%s1805] ss:$2 sm:$0xff]
        %s1807 = scalar_lea.vmem [#allocation2], 145
        %v1808 = vld [vmem:[%s1807] ss:$2 sm:$0xff]
        %s1809 = scalar_lea.vmem [#allocation2], 193
        %v1810 = vld [vmem:[%s1809] ss:$2 sm:$0xff]
        %s1811 = scalar_lea.vmem [#allocation2], 241
        %v1812 = vld [vmem:[%s1811] ss:$2 sm:$0xff]
        %s1813 = scalar_lea.vmem [#allocation2], 289
        %v1814 = vld [vmem:[%s1813] ss:$2 sm:$0xff]
        %s1815 = scalar_lea.vmem [#allocation2], 337
        %v1816 = vld [vmem:[%s1815] ss:$2 sm:$0xff]
        %s1817 = scalar_lea.vmem [#allocation2], 2
        %v1818 = vld [vmem:[%s1817] ss:$2 sm:$0xff]
        %s1819 = scalar_lea.vmem [#allocation2], 50
        %v1820 = vld [vmem:[%s1819] ss:$2 sm:$0xff]
        %s1821 = scalar_lea.vmem [#allocation2], 98
        %v1822 = vld [vmem:[%s1821] ss:$2 sm:$0xff]
        %s1823 = scalar_lea.vmem [#allocation2], 146
        %v1824 = vld [vmem:[%s1823] ss:$2 sm:$0xff]
        %s1825 = scalar_lea.vmem [#allocation2], 194
        %v1826 = vld [vmem:[%s1825] ss:$2 sm:$0xff]
        %s1827 = scalar_lea.vmem [#allocation2], 242
        %v1828 = vld [vmem:[%s1827] ss:$2 sm:$0xff]
        %s1829 = scalar_lea.vmem [#allocation2], 290
        %v1830 = vld [vmem:[%s1829] ss:$2 sm:$0xff]
        %s1831 = scalar_lea.vmem [#allocation2], 338
        %v1832 = vld [vmem:[%s1831] ss:$2 sm:$0xff]
        %s1833 = scalar_lea.vmem [#allocation2], 24
        %v1834 = vld [vmem:[%s1833] ss:$2 sm:$0xff]
        %s1835 = scalar_lea.vmem %s1833, 48 [#allocation2]
        %v1836 = vld [vmem:[%s1835] ss:$2 sm:$0xff]
        %s1837 = scalar_lea.vmem %s1833, 96 [#allocation2]
        %v1838 = vld [vmem:[%s1837] ss:$2 sm:$0xff]
        %s1839 = scalar_lea.vmem %s1833, 144 [#allocation2]
        %v1840 = vld [vmem:[%s1839] ss:$2 sm:$0xff]
        %s1841 = scalar_lea.vmem %s1833, 192 [#allocation2]
        %v1842 = vld [vmem:[%s1841] ss:$2 sm:$0xff]
        %s1843 = scalar_lea.vmem %s1833, 240 [#allocation2]
        %v1844 = vld [vmem:[%s1843] ss:$2 sm:$0xff]
        %s1845 = scalar_lea.vmem %s1833, 288 [#allocation2]
        %v1846 = vld [vmem:[%s1845] ss:$2 sm:$0xff]
        %s1847 = scalar_lea.vmem %s1833, 336 [#allocation2]
        %v1848 = vld [vmem:[%s1847] ss:$2 sm:$0xff]
        %s1849 = scalar_lea.vmem %s1833, 1 [#allocation2]
        %v1850 = vld [vmem:[%s1849] ss:$2 sm:$0xff]
        %s1851 = scalar_lea.vmem %s1833, 49 [#allocation2]
        %v1852 = vld [vmem:[%s1851] ss:$2 sm:$0xff]
        %s1853 = scalar_lea.vmem %s1833, 97 [#allocation2]
        %v1854 = vld [vmem:[%s1853] ss:$2 sm:$0xff]
        %s1855 = scalar_lea.vmem %s1833, 145 [#allocation2]
        %v1856 = vld [vmem:[%s1855] ss:$2 sm:$0xff]
        %s1857 = scalar_lea.vmem %s1833, 193 [#allocation2]
        %v1858 = vld [vmem:[%s1857] ss:$2 sm:$0xff]
        %s1859 = scalar_lea.vmem %s1833, 241 [#allocation2]
        %v1860 = vld [vmem:[%s1859] ss:$2 sm:$0xff]
        %s1861 = scalar_lea.vmem %s1833, 289 [#allocation2]
        %v1862 = vld [vmem:[%s1861] ss:$2 sm:$0xff]
        %s1863 = scalar_lea.vmem %s1833, 337 [#allocation2]
        %v1864 = vld [vmem:[%s1863] ss:$2 sm:$0xff]
        %s1865 = scalar_lea.vmem %s1833, 2 [#allocation2]
        %v1866 = vld [vmem:[%s1865] ss:$2 sm:$0xff]
        %s1867 = scalar_lea.vmem %s1833, 50 [#allocation2]
        %v1868 = vld [vmem:[%s1867] ss:$2 sm:$0xff]
        %s1869 = scalar_lea.vmem %s1833, 98 [#allocation2]
        %v1870 = vld [vmem:[%s1869] ss:$2 sm:$0xff]
        %s1871 = scalar_lea.vmem %s1833, 146 [#allocation2]
        %v1872 = vld [vmem:[%s1871] ss:$2 sm:$0xff]
        %s1873 = scalar_lea.vmem %s1833, 194 [#allocation2]
        %v1874 = vld [vmem:[%s1873] ss:$2 sm:$0xff]
        %s1875 = scalar_lea.vmem %s1833, 242 [#allocation2]
        %v1876 = vld [vmem:[%s1875] ss:$2 sm:$0xff]
        %s1877 = scalar_lea.vmem %s1833, 290 [#allocation2]
        %v1878 = vld [vmem:[%s1877] ss:$2 sm:$0xff]
        %s1879 = scalar_lea.vmem %s1833, 338 [#allocation2]
        %v1880 = vld [vmem:[%s1879] ss:$2 sm:$0xff]
        %s1881 = scalar_lea.vmem [#allocation2], 48
        %v1882 = vld [vmem:[%s1881] ss:$2 sm:$0xff]
        %s1883 = scalar_lea.vmem %s1881, 48 [#allocation2]
        %v1884 = vld [vmem:[%s1883] ss:$2 sm:$0xff]
        %s1885 = scalar_lea.vmem %s1881, 96 [#allocation2]
        %v1886 = vld [vmem:[%s1885] ss:$2 sm:$0xff]
        %s1887 = scalar_lea.vmem %s1881, 144 [#allocation2]
        %v1888 = vld [vmem:[%s1887] ss:$2 sm:$0xff]
        %s1889 = scalar_lea.vmem %s1881, 192 [#allocation2]
        %v1890 = vld [vmem:[%s1889] ss:$2 sm:$0xff]
        %s1891 = scalar_lea.vmem %s1881, 240 [#allocation2]
        %v1892 = vld [vmem:[%s1891] ss:$2 sm:$0xff]
        %s1893 = scalar_lea.vmem %s1881, 288 [#allocation2]
        %v1894 = vld [vmem:[%s1893] ss:$2 sm:$0xff]
        %s1895 = scalar_lea.vmem %s1881, 336 [#allocation2]
        %v1896 = vld [vmem:[%s1895] ss:$2 sm:$0xff]
        %s1897 = scalar_lea.vmem %s1881, 1 [#allocation2]
        %v1898 = vld [vmem:[%s1897] ss:$2 sm:$0xff]
        %s1899 = scalar_lea.vmem %s1881, 49 [#allocation2]
        %v1900 = vld [vmem:[%s1899] ss:$2 sm:$0xff]
        %s1901 = scalar_lea.vmem %s1881, 97 [#allocation2]
        %v1902 = vld [vmem:[%s1901] ss:$2 sm:$0xff]
        %s1903 = scalar_lea.vmem %s1881, 145 [#allocation2]
        %v1904 = vld [vmem:[%s1903] ss:$2 sm:$0xff]
        %s1905 = scalar_lea.vmem %s1881, 193 [#allocation2]
        %v1906 = vld [vmem:[%s1905] ss:$2 sm:$0xff]
        %s1907 = scalar_lea.vmem %s1881, 241 [#allocation2]
        %v1908 = vld [vmem:[%s1907] ss:$2 sm:$0xff]
        %s1909 = scalar_lea.vmem %s1881, 289 [#allocation2]
        %v1910 = vld [vmem:[%s1909] ss:$2 sm:$0xff]
        %s1911 = scalar_lea.vmem %s1881, 337 [#allocation2]
        %v1912 = vld [vmem:[%s1911] ss:$2 sm:$0xff]
        %s1913 = scalar_lea.vmem %s1881, 2 [#allocation2]
        %v1914 = vld [vmem:[%s1913] ss:$2 sm:$0xff]
        %s1915 = scalar_lea.vmem %s1881, 50 [#allocation2]
        %v1916 = vld [vmem:[%s1915] ss:$2 sm:$0xff]
        %s1917 = scalar_lea.vmem %s1881, 98 [#allocation2]
        %v1918 = vld [vmem:[%s1917] ss:$2 sm:$0xff]
        %s1919 = scalar_lea.vmem %s1881, 146 [#allocation2]
        %v1920 = vld [vmem:[%s1919] ss:$2 sm:$0xff]
        %s1921 = scalar_lea.vmem %s1881, 194 [#allocation2]
        %v1922 = vld [vmem:[%s1921] ss:$2 sm:$0xff]
        %s1923 = scalar_lea.vmem %s1881, 242 [#allocation2]
        %v1924 = vld [vmem:[%s1923] ss:$2 sm:$0xff]
        %s1925 = scalar_lea.vmem %s1881, 290 [#allocation2]
        %v1926 = vld [vmem:[%s1925] ss:$2 sm:$0xff]
        %s1927 = scalar_lea.vmem %s1881, 338 [#allocation2]
        %v1928 = vld [vmem:[%s1927] ss:$2 sm:$0xff]
        %1937 = vrot.lane.b32.xlu0 %v1802, 4
        %v1938 = vpop.permute.xlu0 %1937
        %1939 = vrot.lane.b32.xlu0 %v1804, 4
        %v1940 = vpop.permute.xlu0 %1939
        %1941 = vrot.lane.b32.xlu0 %v1806, 4
        %v1942 = vpop.permute.xlu0 %1941
        %1943 = vrot.lane.b32.xlu0 %v1808, 4
        %v1944 = vpop.permute.xlu0 %1943
        %1945 = vrot.lane.b32.xlu0 %v1810, 4
        %v1946 = vpop.permute.xlu0 %1945
        %1947 = vrot.lane.b32.xlu0 %v1812, 4
        %v1948 = vpop.permute.xlu0 %1947
        %1949 = vrot.lane.b32.xlu0 %v1814, 4
        %v1950 = vpop.permute.xlu0 %1949
        %1951 = vrot.lane.b32.xlu0 %v1816, 4
        %v1952 = vpop.permute.xlu0 %1951
        %1969 = vrot.lane.b32.xlu0 %v1818, 8
        %v1970 = vpop.permute.xlu0 %1969
        %1971 = vrot.lane.b32.xlu0 %v1820, 8
        %v1972 = vpop.permute.xlu0 %1971
        %1973 = vrot.lane.b32.xlu0 %v1822, 8
        %v1974 = vpop.permute.xlu0 %1973
        %1975 = vrot.lane.b32.xlu0 %v1824, 8
        %v1976 = vpop.permute.xlu0 %1975
        %1977 = vrot.lane.b32.xlu0 %v1826, 8
        %v1978 = vpop.permute.xlu0 %1977
        %1979 = vrot.lane.b32.xlu0 %v1828, 8
        %v1980 = vpop.permute.xlu0 %1979
        %1981 = vrot.lane.b32.xlu0 %v1830, 8
        %v1982 = vpop.permute.xlu0 %1981
        %1983 = vrot.lane.b32.xlu0 %v1832, 8
        %v1984 = vpop.permute.xlu0 %1983
        %2001 = vrot.lane.b32.xlu0 %v1834, 12
        %v2002 = vpop.permute.xlu0 %2001
        %2003 = vrot.lane.b32.xlu0 %v1836, 12
        %v2004 = vpop.permute.xlu0 %2003
        %2005 = vrot.lane.b32.xlu0 %v1838, 12
        %v2006 = vpop.permute.xlu0 %2005
        %2007 = vrot.lane.b32.xlu0 %v1840, 12
        %v2008 = vpop.permute.xlu0 %2007
        %2009 = vrot.lane.b32.xlu0 %v1842, 12
        %v2010 = vpop.permute.xlu0 %2009
        %2011 = vrot.lane.b32.xlu0 %v1844, 12
        %v2012 = vpop.permute.xlu0 %2011
        %2013 = vrot.lane.b32.xlu0 %v1846, 12
        %v2014 = vpop.permute.xlu0 %2013
        %2015 = vrot.lane.b32.xlu0 %v1848, 12
        %v2016 = vpop.permute.xlu0 %2015
        %2033 = vrot.lane.b32.xlu0 %v1850, 16
        %v2034 = vpop.permute.xlu0 %2033
        %2035 = vrot.lane.b32.xlu0 %v1852, 16
        %v2036 = vpop.permute.xlu0 %2035
        %2037 = vrot.lane.b32.xlu0 %v1854, 16
        %v2038 = vpop.permute.xlu0 %2037
        %2039 = vrot.lane.b32.xlu0 %v1856, 16
        %v2040 = vpop.permute.xlu0 %2039
        %2041 = vrot.lane.b32.xlu0 %v1858, 16
        %v2042 = vpop.permute.xlu0 %2041
        %2043 = vrot.lane.b32.xlu0 %v1860, 16
        %v2044 = vpop.permute.xlu0 %2043
        %2045 = vrot.lane.b32.xlu0 %v1862, 16
        %v2046 = vpop.permute.xlu0 %2045
        %2047 = vrot.lane.b32.xlu0 %v1864, 16
        %v2048 = vpop.permute.xlu0 %2047
        %2065 = vrot.lane.b32.xlu0 %v1866, 20
        %v2066 = vpop.permute.xlu0 %2065
        %2067 = vrot.lane.b32.xlu0 %v1868, 20
        %v2068 = vpop.permute.xlu0 %2067
        %2069 = vrot.lane.b32.xlu0 %v1870, 20
        %v2070 = vpop.permute.xlu0 %2069
        %2071 = vrot.lane.b32.xlu0 %v1872, 20
        %v2072 = vpop.permute.xlu0 %2071
        %2073 = vrot.lane.b32.xlu0 %v1874, 20
        %v2074 = vpop.permute.xlu0 %2073
        %2075 = vrot.lane.b32.xlu0 %v1876, 20
        %v2076 = vpop.permute.xlu0 %2075
        %2077 = vrot.lane.b32.xlu0 %v1878, 20
        %v2078 = vpop.permute.xlu0 %2077
        %2079 = vrot.lane.b32.xlu0 %v1880, 20
        %v2080 = vpop.permute.xlu0 %2079
        %2097 = vrot.lane.b32.xlu0 %v1882, 24
        %v2098 = vpop.permute.xlu0 %2097
        %2099 = vrot.lane.b32.xlu0 %v1884, 24
        %v2100 = vpop.permute.xlu0 %2099
        %2101 = vrot.lane.b32.xlu0 %v1886, 24
        %v2102 = vpop.permute.xlu0 %2101
        %2103 = vrot.lane.b32.xlu0 %v1888, 24
        %v2104 = vpop.permute.xlu0 %2103
        %2105 = vrot.lane.b32.xlu0 %v1890, 24
        %v2106 = vpop.permute.xlu0 %2105
        %2107 = vrot.lane.b32.xlu0 %v1892, 24
        %v2108 = vpop.permute.xlu0 %2107
        %2109 = vrot.lane.b32.xlu0 %v1894, 24
        %v2110 = vpop.permute.xlu0 %2109
        %2111 = vrot.lane.b32.xlu0 %v1896, 24
        %v2112 = vpop.permute.xlu0 %2111
        %2129 = vrot.lane.b32.xlu0 %v1898, 28
        %v2130 = vpop.permute.xlu0 %2129
        %2131 = vrot.lane.b32.xlu0 %v1900, 28
        %v2132 = vpop.permute.xlu0 %2131
        %2133 = vrot.lane.b32.xlu0 %v1902, 28
        %v2134 = vpop.permute.xlu0 %2133
        %2135 = vrot.lane.b32.xlu0 %v1904, 28
        %v2136 = vpop.permute.xlu0 %2135
        %2137 = vrot.lane.b32.xlu0 %v1906, 28
        %v2138 = vpop.permute.xlu0 %2137
        %2139 = vrot.lane.b32.xlu0 %v1908, 28
        %v2140 = vpop.permute.xlu0 %2139
        %2141 = vrot.lane.b32.xlu0 %v1910, 28
        %v2142 = vpop.permute.xlu0 %2141
        %2143 = vrot.lane.b32.xlu0 %v1912, 28
        %v2144 = vpop.permute.xlu0 %2143
        %2161 = vrot.lane.b32.xlu0 %v1914, 32
        %v2162 = vpop.permute.xlu0 %2161
        %2163 = vrot.lane.b32.xlu0 %v1916, 32
        %v2164 = vpop.permute.xlu0 %2163
        %2165 = vrot.lane.b32.xlu0 %v1918, 32
        %v2166 = vpop.permute.xlu0 %2165
        %2167 = vrot.lane.b32.xlu0 %v1920, 32
        %v2168 = vpop.permute.xlu0 %2167
        %2169 = vrot.lane.b32.xlu0 %v1922, 32
        %v2170 = vpop.permute.xlu0 %2169
        %2171 = vrot.lane.b32.xlu0 %v1924, 32
        %v2172 = vpop.permute.xlu0 %2171
        %2173 = vrot.lane.b32.xlu0 %v1926, 32
        %v2174 = vpop.permute.xlu0 %2173
        %2175 = vrot.lane.b32.xlu0 %v1928, 32
        %v2176 = vpop.permute.xlu0 %2175
        %v2185 = vsel %vm780, %v1786, %v1938
        %v2186 = vsel %vm780, %v1788, %v1940
        %v2187 = vsel %vm780, %v1790, %v1942
        %v2188 = vsel %vm780, %v1792, %v1944
        %v2189 = vsel %vm780, %v1794, %v1946
        %v2190 = vsel %vm780, %v1796, %v1948
        %v2191 = vsel %vm780, %v1798, %v1950
        %v2192 = vsel %vm780, %v1800, %v1952
        %vm2193 = vcmask 64512
        %v2194 = vsel %vm2193, %v2185, %v1970
        %v2195 = vsel %vm2193, %v2186, %v1972
        %v2196 = vsel %vm2193, %v2187, %v1974
        %v2197 = vsel %vm2193, %v2188, %v1976
        %v2198 = vsel %vm2193, %v2189, %v1978
        %v2199 = vsel %vm2193, %v2190, %v1980
        %v2200 = vsel %vm2193, %v2191, %v1982
        %v2201 = vsel %vm2193, %v2192, %v1984
        %vm2202 = vcmask 97280
        %v2203 = vsel %vm2202, %v2194, %v2002
        %v2204 = vsel %vm2202, %v2195, %v2004
        %v2205 = vsel %vm2202, %v2196, %v2006
        %v2206 = vsel %vm2202, %v2197, %v2008
        %v2207 = vsel %vm2202, %v2198, %v2010
        %v2208 = vsel %vm2202, %v2199, %v2012
        %v2209 = vsel %vm2202, %v2200, %v2014
        %v2210 = vsel %vm2202, %v2201, %v2016
        %vm2211 = vcmask 130048
        %v2212 = vsel %vm2211, %v2203, %v2034
        %v2213 = vsel %vm2211, %v2204, %v2036
        %v2214 = vsel %vm2211, %v2205, %v2038
        %v2215 = vsel %vm2211, %v2206, %v2040
        %v2216 = vsel %vm2211, %v2207, %v2042
        %v2217 = vsel %vm2211, %v2208, %v2044
        %v2218 = vsel %vm2211, %v2209, %v2046
        %v2219 = vsel %vm2211, %v2210, %v2048
        %vm2220 = vcmask 162816
        %v2221 = vsel %vm2220, %v2212, %v2066
        %v2222 = vsel %vm2220, %v2213, %v2068
        %v2223 = vsel %vm2220, %v2214, %v2070
        %v2224 = vsel %vm2220, %v2215, %v2072
        %v2225 = vsel %vm2220, %v2216, %v2074
        %v2226 = vsel %vm2220, %v2217, %v2076
        %v2227 = vsel %vm2220, %v2218, %v2078
        %v2228 = vsel %vm2220, %v2219, %v2080
        %vm2229 = vcmask 195584
        %v2230 = vsel %vm2229, %v2221, %v2098
        %v2231 = vsel %vm2229, %v2222, %v2100
        %v2232 = vsel %vm2229, %v2223, %v2102
        %v2233 = vsel %vm2229, %v2224, %v2104
        %v2234 = vsel %vm2229, %v2225, %v2106
        %v2235 = vsel %vm2229, %v2226, %v2108
        %v2236 = vsel %vm2229, %v2227, %v2110
        %v2237 = vsel %vm2229, %v2228, %v2112
        %vm2238 = vcmask 228352
        %v2239 = vsel %vm2238, %v2230, %v2130
        %v2240 = vsel %vm2238, %v2231, %v2132
        %v2241 = vsel %vm2238, %v2232, %v2134
        %v2242 = vsel %vm2238, %v2233, %v2136
        %v2243 = vsel %vm2238, %v2234, %v2138
        %v2244 = vsel %vm2238, %v2235, %v2140
        %v2245 = vsel %vm2238, %v2236, %v2142
        %v2246 = vsel %vm2238, %v2237, %v2144
        %vm2247 = vcmask 261120
        %v2248 = vsel %vm2247, %v2239, %v2162
        %v2249 = vsel %vm2247, %v2240, %v2164
        %v2250 = vsel %vm2247, %v2241, %v2166
        %v2251 = vsel %vm2247, %v2242, %v2168
        %v2252 = vsel %vm2247, %v2243, %v2170
        %v2253 = vsel %vm2247, %v2244, %v2172
        %v2254 = vsel %vm2247, %v2245, %v2174
        %v2255 = vsel %vm2247, %v2246, %v2176
        %v2256 = vld [vmem:[%s3] sm:$0xff]
        %v2257 = vld [vmem:[%s3 + $0x8] sm:$0xff]
        %v2258 = vld [vmem:[%s3 + $0x10] sm:$0xff]
        %v2259 = vld [vmem:[%s3 + $0x18] sm:$0xff]
        %v2260 = vld [vmem:[%s3 + $0x20] sm:$0xf]
        %v2261 = vld [vmem:[%s4] sm:$0x1]
        %v2263 = vperm.slane %v2261, 0
        %vm2265 = vcmask 293888
        %v2267 = vsel %vm2265, %v2248, 0
        %v2270 = vsel %vm2265, %v2249, 0
        %v2273 = vsel %vm2265, %v2250, 0
        %v2276 = vsel %vm2265, %v2251, 0
        %v2279 = vsel %vm2265, %v2252, 0
        %v2282 = vsel %vm2265, %v2253, 0
        %v2285 = vsel %vm2265, %v2254, 0
        %v2288 = vsel %vm2265, %v2255, 0
        %v2291 = vsel %vm863, %v2260, 0
        %2293 = vmatpush.msra.mxu0 0.0
        %2294 = vmatpush.msra.mxu0 0.0
        %2295 = vmatpush.msra.mxu0 0.0
        %2296 = vmatpush.msra.mxu0 0.0
        %2297 = vmatpush.msra.mxu0 0.0
        %2298 = vmatpush.msra.mxu0 0.0
        %2299 = vmatpush.msra.mxu0 0.0
        %2300 = vmatpush.msra.mxu0 0.0
        %2301 = vmatpush.msra.mxu0 0.0
        %2302 = vmatpush.msra.mxu0 0.0
        %2303 = vmatpush.msra.mxu0 0.0
        %2304 = vmatpush.msra.mxu0 %v2291
        %2305 = vmatpush.msra.mxu0 %v2259
        %2306 = vmatpush.msra.mxu0 %v2258
        %2307 = vmatpush.msra.mxu0 %v2257
        %2308 = vmatpush.msra.mxu0 %v2256
        %2309 = vmatmul.f32.gmra.mxu0 %v2267
        %v2310 = vpop.f32.mrf.mxu0
        %v2311 = vadd.f32 %v2263, %v2310
        %2312 = vmatmul.f32.gmra.mxu0 %v2270
        %v2313 = vpop.f32.mrf.mxu0
        %v2314 = vadd.f32 %v2263, %v2313
        %2315 = vmatmul.f32.gmra.mxu0 %v2273
        %v2316 = vpop.f32.mrf.mxu0
        %v2317 = vadd.f32 %v2263, %v2316
        %2318 = vmatmul.f32.gmra.mxu0 %v2276
        %v2319 = vpop.f32.mrf.mxu0
        %v2320 = vadd.f32 %v2263, %v2319
        %2321 = vmatmul.f32.gmra.mxu0 %v2279
        %v2322 = vpop.f32.mrf.mxu0
        %v2323 = vadd.f32 %v2263, %v2322
        %2324 = vmatmul.f32.gmra.mxu0 %v2282
        %v2325 = vpop.f32.mrf.mxu0
        %v2326 = vadd.f32 %v2263, %v2325
        %2327 = vmatmul.f32.gmra.mxu0 %v2285
        %v2328 = vpop.f32.mrf.mxu0
        %v2329 = vadd.f32 %v2263, %v2328
        %2330 = vmatmul.f32.gmra.mxu0 %v2288
        %v2331 = vpop.f32.mrf.mxu0
        %v2332 = vadd.f32 %v2263, %v2331
        %2333 = vdwg.mxu0
        %v2334 = vmax.f32 %v2311, 0.0
        %v2335 = vmax.f32 %v2314, 0.0
        %v2336 = vmax.f32 %v2317, 0.0
        %v2337 = vmax.f32 %v2320, 0.0
        %v2338 = vmax.f32 %v2323, 0.0
        %v2339 = vmax.f32 %v2326, 0.0
        %v2340 = vmax.f32 %v2329, 0.0
        %v2341 = vmax.f32 %v2332, 0.0
        %v2342 = vld [vmem:[%s5] sm:$0xf]
        %v2343 = vld [vmem:[%s6] sm:$0x1]
        %v2345 = vperm.slane %v2343, 0
        %v2348 = vsel %vm780, %v2334, 0
        %v2351 = vsel %vm780, %v2335, 0
        %v2354 = vsel %vm780, %v2336, 0
        %v2357 = vsel %vm780, %v2337, 0
        %v2360 = vsel %vm780, %v2338, 0
        %v2363 = vsel %vm780, %v2339, 0
        %v2366 = vsel %vm780, %v2340, 0
        %v2369 = vsel %vm780, %v2341, 0
        %v2372 = vsel %vm863, %v2342, 0
        %2374 = vmatpush.msra.mxu0 0.0
        %2375 = vmatpush.msra.mxu0 0.0
        %2376 = vmatpush.msra.mxu0 0.0
        %2377 = vmatpush.msra.mxu0 0.0
        %2378 = vmatpush.msra.mxu0 0.0
        %2379 = vmatpush.msra.mxu0 0.0
        %2380 = vmatpush.msra.mxu0 0.0
        %2381 = vmatpush.msra.mxu0 0.0
        %2382 = vmatpush.msra.mxu0 0.0
        %2383 = vmatpush.msra.mxu0 0.0
        %2384 = vmatpush.msra.mxu0 0.0
        %2385 = vmatpush.msra.mxu0 0.0
        %2386 = vmatpush.msra.mxu0 0.0
        %2387 = vmatpush.msra.mxu0 0.0
        %2388 = vmatpush.msra.mxu0 0.0
        %2389 = vmatpush.msra.mxu0 %v2372
        %2390 = vmatmul.f32.gmra.mxu0 %v2348
        %v2391 = vpop.f32.mrf.mxu0
        %v2392 = vadd.f32 %v2345, %v2391
        %2393 = vmatmul.f32.gmra.mxu0 %v2351
        %v2394 = vpop.f32.mrf.mxu0
        %v2395 = vadd.f32 %v2345, %v2394
        %2396 = vmatmul.f32.gmra.mxu0 %v2354
        %v2397 = vpop.f32.mrf.mxu0
        %v2398 = vadd.f32 %v2345, %v2397
        %2399 = vmatmul.f32.gmra.mxu0 %v2357
        %v2400 = vpop.f32.mrf.mxu0
        %v2401 = vadd.f32 %v2345, %v2400
        %2402 = vmatmul.f32.gmra.mxu0 %v2360
        %v2403 = vpop.f32.mrf.mxu0
        %v2404 = vadd.f32 %v2345, %v2403
        %2405 = vmatmul.f32.gmra.mxu0 %v2363
        %v2406 = vpop.f32.mrf.mxu0
        %v2407 = vadd.f32 %v2345, %v2406
        %2408 = vmatmul.f32.gmra.mxu0 %v2366
        %v2409 = vpop.f32.mrf.mxu0
        %v2410 = vadd.f32 %v2345, %v2409
        %2411 = vmatmul.f32.gmra.mxu0 %v2369
        %v2412 = vpop.f32.mrf.mxu0
        %v2413 = vadd.f32 %v2345, %v2412
        %2414 = vdwg.mxu0
        %s2415 = sadd.s32 %s346, 1
        %s2416 = smul.u32 %s2415, 24
        %s2417 = scalar_lea.vmem %s344, %s2416
        %s2418 = scalar_lea.vmem %s2417, 1
        %v2419 = vld [vmem:[%s2418] ss:$2 sm:$0xff]
        %s2420 = scalar_lea.vmem %s2417, 49
        %v2421 = vld [vmem:[%s2420] ss:$2 sm:$0xff]
        %s2422 = scalar_lea.vmem %s2417, 97
        %v2423 = vld [vmem:[%s2422] ss:$2 sm:$0xff]
        %s2424 = scalar_lea.vmem %s2417, 145
        %v2425 = vld [vmem:[%s2424] ss:$2 sm:$0xff]
        %s2426 = scalar_lea.vmem %s2417, 193
        %v2427 = vld [vmem:[%s2426] ss:$2 sm:$0xff]
        %s2428 = scalar_lea.vmem %s2417, 241
        %v2429 = vld [vmem:[%s2428] ss:$2 sm:$0xff]
        %s2430 = scalar_lea.vmem %s2417, 289
        %v2431 = vld [vmem:[%s2430] ss:$2 sm:$0xff]
        %s2432 = scalar_lea.vmem %s2417, 337
        %v2433 = vld [vmem:[%s2432] ss:$2 sm:$0xff]
        %v2434 = vld [vmem:[%s7] sm:$0xf]
        %v2435 = vld [vmem:[%s8] sm:$0x1]
        %v2437 = vperm.slane %v2435, 0
        %v2440 = vsel %vm780, %v2419, 0
        %v2443 = vsel %vm780, %v2421, 0
        %v2446 = vsel %vm780, %v2423, 0
        %v2449 = vsel %vm780, %v2425, 0
        %v2452 = vsel %vm780, %v2427, 0
        %v2455 = vsel %vm780, %v2429, 0
        %v2458 = vsel %vm780, %v2431, 0
        %v2461 = vsel %vm780, %v2433, 0
        %v2464 = vsel %vm863, %v2434, 0
        %2466 = vmatpush.msra.mxu0 0.0
        %2467 = vmatpush.msra.mxu0 0.0
        %2468 = vmatpush.msra.mxu0 0.0
        %2469 = vmatpush.msra.mxu0 0.0
        %2470 = vmatpush.msra.mxu0 0.0
        %2471 = vmatpush.msra.mxu0 0.0
        %2472 = vmatpush.msra.mxu0 0.0
        %2473 = vmatpush.msra.mxu0 0.0
        %2474 = vmatpush.msra.mxu0 0.0
        %2475 = vmatpush.msra.mxu0 0.0
        %2476 = vmatpush.msra.mxu0 0.0
        %2477 = vmatpush.msra.mxu0 0.0
        %2478 = vmatpush.msra.mxu0 0.0
        %2479 = vmatpush.msra.mxu0 0.0
        %2480 = vmatpush.msra.mxu0 0.0
        %2481 = vmatpush.msra.mxu0 %v2464
        %2482 = vmatmul.f32.gmra.mxu0 %v2440
        %v2483 = vpop.f32.mrf.mxu0
        %v2484 = vadd.f32 %v2437, %v2483
        %2485 = vmatmul.f32.gmra.mxu0 %v2443
        %v2486 = vpop.f32.mrf.mxu0
        %v2487 = vadd.f32 %v2437, %v2486
        %2488 = vmatmul.f32.gmra.mxu0 %v2446
        %v2489 = vpop.f32.mrf.mxu0
        %v2490 = vadd.f32 %v2437, %v2489
        %2491 = vmatmul.f32.gmra.mxu0 %v2449
        %v2492 = vpop.f32.mrf.mxu0
        %v2493 = vadd.f32 %v2437, %v2492
        %2494 = vmatmul.f32.gmra.mxu0 %v2452
        %v2495 = vpop.f32.mrf.mxu0
        %v2496 = vadd.f32 %v2437, %v2495
        %2497 = vmatmul.f32.gmra.mxu0 %v2455
        %v2498 = vpop.f32.mrf.mxu0
        %v2499 = vadd.f32 %v2437, %v2498
        %2500 = vmatmul.f32.gmra.mxu0 %v2458
        %v2501 = vpop.f32.mrf.mxu0
        %v2502 = vadd.f32 %v2437, %v2501
        %2503 = vmatmul.f32.gmra.mxu0 %v2461
        %v2504 = vpop.f32.mrf.mxu0
        %v2505 = vadd.f32 %v2437, %v2504
        %2506 = vdwg.mxu0
        %v2507 = vadd.f32 %v2392, %v2484
        %v2508 = vadd.f32 %v2395, %v2487
        %v2509 = vadd.f32 %v2398, %v2490
        %v2510 = vadd.f32 %v2401, %v2493
        %v2511 = vadd.f32 %v2404, %v2496
        %v2512 = vadd.f32 %v2407, %v2499
        %v2513 = vadd.f32 %v2410, %v2502
        %v2514 = vadd.f32 %v2413, %v2505
        %v2515 = vmax.f32 %v2507, 0.0
        %v2516 = vmax.f32 %v2508, 0.0
        %v2517 = vmax.f32 %v2509, 0.0
        %v2518 = vmax.f32 %v2510, 0.0
        %v2519 = vmax.f32 %v2511, 0.0
        %v2520 = vmax.f32 %v2512, 0.0
        %v2521 = vmax.f32 %v2513, 0.0
        %v2522 = vmax.f32 %v2514, 0.0
        %2523 = vst.msk [vmem:[%s339] sm:$0xff] %vm2211, %v2515
        %2524 = vst.msk [vmem:[%s339 + $0x8] sm:$0xff] %vm2211, %v2516
        %2525 = vst.msk [vmem:[%s339 + $0x10] sm:$0xff] %vm2211, %v2517
        %2526 = vst.msk [vmem:[%s339 + $0x18] sm:$0xff] %vm2211, %v2518
        %2527 = vst.msk [vmem:[%s339 + $0x20] sm:$0xff] %vm2211, %v2519
        %2528 = vst.msk [vmem:[%s339 + $0x28] sm:$0xff] %vm2211, %v2520
        %2529 = vst.msk [vmem:[%s339 + $0x30] sm:$0xff] %vm2211, %v2521
        %2530 = vst.msk [vmem:[%s339 + $0x38] sm:$0xff] %vm2211, %v2522
        %s2531 = sand.u32 %s239, 1
        %s2532 = scalar_lea.sflag [#allocation4], %s2531
        %s2533 = sand.u32 %s239, 1
        %s2534 = smul.addr %s2533, 64
        %s2535 = scalar_lea.vmem [#allocation3], %s2534
        // Predicated region
        $region57: #{bottleneck_forward.1} parent=55 // pred_check
          %p2536 = pneg %p249
        $region58: #{bottleneck_forward.1} parent=55 // pred_check_branch
          %2538 = sbr.rel (%p2536) target = $region60
        $region59: #{bottleneck_forward.1} parent=55 // pred_region
          %s2539 = smul.u32 8, %s28
          %2541 = vsyncadd %s2532, 0
          %s2542 = smul.addr %s27, 8
          %s2543 = sadd.s32 %s2539, %s2542
          %s2544 = smul.addr %s2543, 8
          %s2545 = scalar_lea.hbm %s9, %s2544
          %s2546 = sshll.u32 %s2535, 4
          %s2547 = int_to_ptr.vmem [resolvable:$true] %s2546
          %s2548 = sshll.u32 %s2545, 4
          %s2549 = int_to_ptr.hbm [resolvable:$true] %s2548
          %2554 = dma.vmem_to_hbm [thread:$0]  %s2547, 1024, %s2549, %s2532, 128, 128, 8
        $region60: #{bottleneck_forward.1} parent=55 // pred_fallthru
          _
      $region56: #{bottleneck_forward.1} parent=5 // pred_fallthru
        _
      %p2555 = scmp.le.s32.totalorder 2, %s18
      // Predicated region
      $region61: #{bottleneck_forward.1} parent=5 // pred_check
        %p2556 = pneg %p2555
      $region62: #{bottleneck_forward.1} parent=5 // pred_check_branch
        %2558 = sbr.rel (%p2556) target = $region64
      $region63: #{bottleneck_forward.1} parent=5 // pred_region
        %s2559 = ssub.s32 %s18, 2
        // Predicated region
        $region65: #{bottleneck_forward.1} parent=63 // pred_check
          %p2560 = pneg %p255
        $region66: #{bottleneck_forward.1} parent=63 // pred_check_branch
          %2562 = sbr.rel (%p2560) target = $region68
        $region67: #{bottleneck_forward.1} parent=63 // pred_region
          %s2563 = sand.u32 %s240, 1
          %s2564 = scalar_lea.sflag [#allocation4], %s2563
          %s2565 = sand.u32 %s240, 1
          %s2566 = smul.addr %s2565, 64
          %s2567 = scalar_lea.vmem [#allocation3], %s2566
          %2569 = dma.done %s2564, 1024
        $region68: #{bottleneck_forward.1} parent=63 // pred_fallthru
          _
      $region64: #{bottleneck_forward.1} parent=5 // pred_fallthru
        _
    $region6: #{bottleneck_forward.1} parent=1 // loop_footer
      %s22 = sadd.s32 1, %s18
    $region7: #{bottleneck_forward.1} parent=1 // loop_footer_branch
      %17 = sbr.rel target = $region3
    $region8: #{bottleneck_forward.1} parent=1 // loop_exit
      _
    %2570 = vsyncpa [#allocation4], 1
    %s2571 = scalar_lea.sflag [#allocation4], 1
    %2572 = vsyncpa %s2571, 1

</llo_original>
